<compile_context>
chip_gen: v7x
topology: tpu7x:2x2x1
jax: 0.10.0
libtpu: 0.0.40
codegen_flags: <defaults>
</compile_context>

<pallas_src>
import jax
import jax.numpy as jnp
from jax import lax
from jax.experimental import pallas as pl
from jax.experimental.pallas import tpu as pltpu

_NEG_BIG = -1.0e30  # finite "minus infinity" for masking / running-max init


def _round_up(x: int, m: int) -> int:
    return ((x + m - 1) // m) * m


def _dcl_row_kernel(q_ref, k1_ref, k2_ref, pos_ref, bias_ref, out_ref,
                    m_ref, l_ref):
    """One (query-tile, key-tile) grid step of the DCL row losses.

    q_ref    : (TM, Dp)  queries pre-scaled by 1/T (compute dtype)
    k1_ref   : (TK, Dp)  z1 key tile               (compute dtype)
    k2_ref   : (TK, Dp)  z2 key tile               (compute dtype)
    pos_ref  : (TM, 1)   precomputed positive term (f32)
    bias_ref : (1, TK)   additive key-padding mask, 0 / -1e30 (f32)
    out_ref  : (TM, 1)   per-row loss (f32)
    m_ref/l_ref : (TM,1) online-logsumexp state (f32 VMEM scratch)
    """
    ki = pl.program_id(1)
    nk = pl.num_programs(1)

    @pl.when(ki == 0)
    def _init():
        m_ref[...] = jnp.full(m_ref.shape, _NEG_BIG, dtype=jnp.float32)
        l_ref[...] = jnp.zeros(l_ref.shape, dtype=jnp.float32)

    q = q_ref[...]
    bias = bias_ref[...]
    # Contraction on the last dim of BOTH operands -> no transpose
    # materialization; bf16 in, f32 accumulate straight off the MXU.
    dims = (((1,), (1,)), ((), ()))
    l1 = lax.dot_general(q, k1_ref[...], dims,
                         preferred_element_type=jnp.float32) + bias
    l2 = lax.dot_general(q, k2_ref[...], dims,
                         preferred_element_type=jnp.float32) + bias

    # Online logsumexp accumulation over key tiles (both slabs per step).
    m_prev = m_ref[...]
    m_cur = jnp.maximum(jnp.max(l1, axis=1, keepdims=True),
                        jnp.max(l2, axis=1, keepdims=True))
    m_new = jnp.maximum(m_prev, m_cur)
    s = (jnp.sum(jnp.exp(l1 - m_new), axis=1, keepdims=True) +
         jnp.sum(jnp.exp(l2 - m_new), axis=1, keepdims=True))
    l_ref[...] = jnp.exp(m_prev - m_new) * l_ref[...] + s
    m_ref[...] = m_new

    @pl.when(ki == nk - 1)
    def _finalize():
        out_ref[...] = pos_ref[...] + m_ref[...] + jnp.log(l_ref[...])


def _per_core_vmem_limit() -> int:
    """Per-generation scoped-VMEM limit (bytes) with a conservative fallback."""
    try:
        cap = int(pltpu.get_tpu_info().vmem_capacity_bytes)
    except Exception:
        cap = 64 * 1024 * 1024  # most restrictive case: v7x per-TensorCore VMEM
    return min((cap * 3) // 4, 100 * 1024 * 1024)


def _vmem_estimate(tm: int, tk: int, d_pad: int, csize: int) -> int:
    """Rough per-step VMEM footprint (double-buffered inputs + f32 slabs)."""
    keys = 2 * 2 * tk * d_pad * csize      # k1, k2 double-buffered
    query = 2 * tm * d_pad * csize         # query tile double-buffered
    slabs = 4 * tm * tk * 4                # f32 logits + exp temporaries
    small = 8 * tm * 4 + 4 * tk * 4 + (64 << 10)
    return keys + query + slabs + small


def decoupled_contrastive_loss_pallas(z1, z2, *, temperature: float = 0.1,
                                      use_vmf: bool = False, sigma: float = 0.5,
                                      block_q: int = 256, block_k: int = 512,
                                      compute_dtype=jnp.bfloat16,
                                      keys_resident: bool | None = None):
    """One-way decoupled contrastive loss (scalar f32)."""
    n, d = z1.shape
    assert z2.shape == (n, d), (z1.shape, z2.shape)

    inv_t = float(1.0 / temperature)
    z1f = z1.astype(jnp.float32)
    z2f = z2.astype(jnp.float32)

    # Positive term and (optional) vMF weight: O(N*D) + O(N) in plain f32 JAX.
    diag = jnp.sum(z1f * z2f, axis=1)                      # diag(z1 @ z2.T)
    pos = -diag * inv_t
    if use_vmf:
        pos = pos * (2.0 - n * jax.nn.softmax(diag / sigma))
    pos = pos.reshape(n, 1).astype(jnp.float32)

    # MXU operands: fold 1/T into the query once (fused with the cast); keys
    # stay unscaled.  Accumulation is f32 inside the kernel.
    q = (z1f * inv_t).astype(compute_dtype)
    k1 = z1.astype(compute_dtype)
    k2 = z2.astype(compute_dtype)

    # --- Tile selection ------------------------------------------------------
    d_pad = _round_up(d, 128)                 # lane-dense contraction dim
    tm = min(block_q, _round_up(n, 8))
    # Prefer >= 2 query tiles (v7x megacore sharding of the "parallel" axis)
    # as long as tiles stay reasonably MXU-friendly.
    while tm >= 128 and _round_up(n, tm) // tm < 2:
        tm //= 2
    n_pad = _round_up(n, tm)

    csize = jnp.dtype(compute_dtype).itemsize
    vmem_limit = _per_core_vmem_limit()
    budget = vmem_limit - (8 << 20)           # pipelining / spill headroom
    tk_full = _round_up(n, 128)
    if keys_resident is None:
        keys_resident = _vmem_estimate(tm, tk_full, d_pad, csize) <= budget
    if keys_resident:
        tk = tk_full                          # single key step: keys DMA'd once
    else:
        tk = min(block_k, tk_full)
        while tk > 256 and _vmem_estimate(tm, tk, d_pad, csize) > budget:
            tk //= 2
    k_pad = _round_up(n, tk)

    # --- Zero padding (masked via bias / sliced off after the kernel) --------
    def _pad2(a, rows, cols):
        r, c = a.shape
        if rows == r and cols == c:
            return a
        return jnp.pad(a, ((0, rows - r), (0, cols - c)))

    qp = _pad2(q, n_pad, d_pad)
    k1p = _pad2(k1, k_pad, d_pad)
    k2p = _pad2(k2, k_pad, d_pad)
    posp = _pad2(pos, n_pad, 1)
    bias = jnp.where(jnp.arange(k_pad) < n, 0.0, _NEG_BIG)
    bias = bias.astype(jnp.float32).reshape(1, k_pad)

    grid = (n_pad // tm, k_pad // tk)

    row_loss = pl.pallas_call(
        _dcl_row_kernel,
        out_shape=jax.ShapeDtypeStruct((n_pad, 1), jnp.float32),
        grid_spec=pltpu.PrefetchScalarGridSpec(
            num_scalar_prefetch=0,
            grid=grid,
            in_specs=[
                pl.BlockSpec((tm, d_pad), lambda qi, ki: (qi, 0)),  # 1/T-scaled q
                pl.BlockSpec((tk, d_pad), lambda qi, ki: (ki, 0)),  # z1 key tile
                pl.BlockSpec((tk, d_pad), lambda qi, ki: (ki, 0)),  # z2 key tile
                pl.BlockSpec((tm, 1), lambda qi, ki: (qi, 0)),      # positive term
                pl.BlockSpec((1, tk), lambda qi, ki: (0, ki)),      # key-pad bias
            ],
            out_specs=pl.BlockSpec((tm, 1), lambda qi, ki: (qi, 0)),
            scratch_shapes=[pltpu.VMEM((tm, 1), jnp.float32),   # running max
                            pltpu.VMEM((tm, 1), jnp.float32)],  # running sum
        ),
        compiler_params=pltpu.CompilerParams(
            # query axis sharded across TensorCores (v7x); key axis = reduction.
            dimension_semantics=("parallel", "arbitrary"),
            vmem_limit_bytes=vmem_limit,
        ),
    )(qp, k1p, k2p, posp, bias)

    return jnp.mean(row_loss[:n, 0])


class DecoupledContrastiveLossPallas:
    """JAX/Pallas port of conduit's DecoupledContrastiveLoss (forward only)."""

    def __init__(self, temperature: float = 0.1, *, use_vmf: bool = False,
                 sigma: float = 0.5):
        self.temperature = temperature
        self.use_vmf = use_vmf
        self.sigma = sigma

    def __call__(self, z1, z2):
        return decoupled_contrastive_loss_pallas(
            z1, z2, temperature=self.temperature,
            use_vmf=self.use_vmf, sigma=self.sigma)

    @classmethod
    def with_vmf_weighting(cls, sigma: float = 0.5, *, temperature: float = 0.1):
        return cls(temperature=temperature, use_vmf=True, sigma=sigma)


def _reference_loss(z1, z2, temperature=0.1, use_vmf=False, sigma=0.5):
    """Pure-JAX reference faithful to the PyTorch semantics (incl. eps*eye)."""
    z1 = z1.astype(jnp.float32)
    z2 = z2.astype(jnp.float32)
    n = z1.shape[0]
    hp = lax.Precision.HIGHEST
    cross = jnp.matmul(z1, z2.T, precision=hp)
    positive = -jnp.diag(cross) / temperature
    if use_vmf:
        positive = positive * (2.0 - n * jax.nn.softmax(
            jnp.sum(z1 * z2, axis=1) / sigma))
    neg = jnp.concatenate([jnp.matmul(z1, z1.T, precision=hp), cross],
                          axis=1) / temperature
    mask = jnp.concatenate([jnp.eye(n), jnp.eye(n)], axis=1)
    eps = jnp.finfo(jnp.float32).eps
    negative = jax.scipy.special.logsumexp(neg + mask * eps, axis=1)
    return jnp.mean(positive + negative)


def _make_inputs(n, d, key):
    k1, k2 = jax.random.split(key)
    z1 = jax.random.normal(k1, (n, d), dtype=jnp.float32)
    z2 = jax.random.normal(k2, (n, d), dtype=jnp.float32)
    z1 = z1 / jnp.linalg.norm(z1, axis=1, keepdims=True)
    z2 = z2 / jnp.linalg.norm(z2, axis=1, keepdims=True)
    return z1, z2


if __name__ == "__main__":
    key = jax.random.PRNGKey(0)

    # (name, N, D, use_vmf, extra kwargs) — aligned, vMF, non-multiple, tiny,
    # plus a forced multi-key-step tiled run to exercise the online LSE path.
    cases = [
        ("aligned", 256, 128, False, {}),
        ("aligned_vmf", 256, 128, True, {}),
        ("non_multiple", 100, 96, False, {}),
        ("tiny", 8, 32, False, {}),
        ("tiled_multi_step", 300, 96, False,
         {"keys_resident": False, "block_k": 128, "block_q": 128}),
    ]

    # Tolerance accommodates the bf16 MXU operands (f32 accumulation) vs. the
    # HIGHEST-precision f32 XLA reference; loss magnitude is O(10).
    rtol, atol = 2e-3, 2e-2

    for i, (name, n, d, vmf, kwargs) in enumerate(cases):
        z1, z2 = _make_inputs(n, d, jax.random.fold_in(key, i))
        loss = decoupled_contrastive_loss_pallas(
            z1, z2, temperature=0.1, use_vmf=vmf, sigma=0.5, **kwargs)
        loss = jax.block_until_ready(loss)
        ref = _reference_loss(z1, z2, temperature=0.1, use_vmf=vmf, sigma=0.5)
        assert jnp.allclose(loss, ref, rtol=rtol, atol=atol), (name, loss, ref)

    # Also exercise the module-style wrappers once.
    z1, z2 = _make_inputs(256, 128, jax.random.fold_in(key, 100))
    mod = DecoupledContrastiveLossPallas.with_vmf_weighting(sigma=0.5,
                                                            temperature=0.1)
    jax.block_until_ready(mod(z1, z2))

    print("KERNEL_OK")
</pallas_src>

<mosaic_0001>
module attributes {stable_mosaic.version = 11 : i64} {
  func.func @_dcl_row_kernel(%arg0: i32, %arg1: i32, %arg2: memref<128x128xbf16, #tpu.memory_space<vmem>>, %arg3: memref<256x128xbf16, #tpu.memory_space<vmem>>, %arg4: memref<256x128xbf16, #tpu.memory_space<vmem>>, %arg5: memref<128x1xf32, #tpu.memory_space<vmem>>, %arg6: memref<1x256xf32, #tpu.memory_space<vmem>>, %arg7: memref<128x1xf32, #tpu.memory_space<vmem>>, %arg8: memref<128x1xf32, #tpu.memory_space<vmem>>, %arg9: memref<128x1xf32, #tpu.memory_space<vmem>>) attributes {dimension_semantics = [#tpu.dimension_semantics<parallel>, #tpu.dimension_semantics<arbitrary>], iteration_bounds = array<i64: 2, 1>, scalar_prefetch = 0 : i64, scratch_operands = 2 : i64, tpu.core_type = #tpu.core_type<tc>, window_params = [{transform_indices = @transform_0, window_bounds = array<i64: 128, 128>}, {transform_indices = @transform_1, window_bounds = array<i64: 256, 128>}, {transform_indices = @transform_2, window_bounds = array<i64: 256, 128>}, {transform_indices = @transform_3, window_bounds = array<i64: 128, 1>}, {transform_indices = @transform_4, window_bounds = array<i64: 1, 256>}, {transform_indices = @transform_5, window_bounds = array<i64: 128, 1>}]} {
    %c0_i32 = arith.constant 0 : i32
    %0 = arith.cmpi eq, %arg1, %c0_i32 : i32
    %1 = arith.extui %0 : i1 to i32
    %c0_i32_0 = arith.constant 0 : i32
    %2 = arith.cmpi ne, %1, %c0_i32_0 : i32
    scf.if %2 {
      %cst_23 = arith.constant -1.000000e+30 : f32
      %41 = vector.broadcast %cst_23 : f32 to vector<128x1xf32>
      %c0_24 = arith.constant 0 : index
      %c0_25 = arith.constant 0 : index
      %42 = vector.load %arg8[%c0_24, %c0_25] : memref<128x1xf32, #tpu.memory_space<vmem>>, vector<128x1xf32>
      tpu.vector_store %arg8[%c0_24, %c0_25], %41 {strides = array<i32>} : memref<128x1xf32, #tpu.memory_space<vmem>>, vector<128x1xf32>,
      %cst_26 = arith.constant 0.000000e+00 : f32
      %43 = vector.broadcast %cst_26 : f32 to vector<128x1xf32>
      %c0_27 = arith.constant 0 : index
      %c0_28 = arith.constant 0 : index
      %44 = vector.load %arg9[%c0_27, %c0_28] : memref<128x1xf32, #tpu.memory_space<vmem>>, vector<128x1xf32>
      tpu.vector_store %arg9[%c0_27, %c0_28], %43 {strides = array<i32>} : memref<128x1xf32, #tpu.memory_space<vmem>>, vector<128x1xf32>,
    } else {
    }
    %c0 = arith.constant 0 : index
    %c0_1 = arith.constant 0 : index
    %3 = vector.load %arg2[%c0, %c0_1] : memref<128x128xbf16, #tpu.memory_space<vmem>>, vector<128x128xbf16>
    %c0_2 = arith.constant 0 : index
    %c0_3 = arith.constant 0 : index
    %4 = vector.load %arg6[%c0_2, %c0_3] : memref<1x256xf32, #tpu.memory_space<vmem>>, vector<1x256xf32>
    %c0_4 = arith.constant 0 : index
    %c0_5 = arith.constant 0 : index
    %5 = vector.load %arg3[%c0_4, %c0_5] : memref<256x128xbf16, #tpu.memory_space<vmem>>, vector<256x128xbf16>
    %cst = arith.constant dense<0.000000e+00> : vector<128x256xf32>
    %6 = tpu.matmul %3, %5, %cst {dimension_numbers = #tpu.dot_dimension_numbers<[1], [1], [0], [0], [0, 0, 1, 0], [], []>} : vector<128x128xbf16>, vector<256x128xbf16>, vector<128x256xf32> -> vector<128x256xf32>
    %7 = vector.broadcast %4 : vector<1x256xf32> to vector<128x256xf32>
    %8 = arith.addf %6, %7 : vector<128x256xf32>
    %c0_6 = arith.constant 0 : index
    %c0_7 = arith.constant 0 : index
    %9 = vector.load %arg4[%c0_6, %c0_7] : memref<256x128xbf16, #tpu.memory_space<vmem>>, vector<256x128xbf16>
    %cst_8 = arith.constant dense<0.000000e+00> : vector<128x256xf32>
    %10 = tpu.matmul %3, %9, %cst_8 {dimension_numbers = #tpu.dot_dimension_numbers<[1], [1], [0], [0], [0, 0, 1, 0], [], []>} : vector<128x128xbf16>, vector<256x128xbf16>, vector<128x256xf32> -> vector<128x256xf32>
    %11 = vector.broadcast %4 : vector<1x256xf32> to vector<128x256xf32>
    %12 = arith.addf %10, %11 : vector<128x256xf32>
    %c0_9 = arith.constant 0 : index
    %c0_10 = arith.constant 0 : index
    %13 = vector.load %arg8[%c0_9, %c0_10] : memref<128x1xf32, #tpu.memory_space<vmem>>, vector<128x1xf32>
    %cst_11 = arith.constant dense<0xFF800000> : vector<128xf32>
    %14 = vector.multi_reduction <maximumf>, %8, %cst_11 [1] : vector<128x256xf32> to vector<128xf32>
    %15 = vector.shape_cast %14 : vector<128xf32> to vector<128x1xf32>
    %cst_12 = arith.constant dense<0xFF800000> : vector<128xf32>
    %16 = vector.multi_reduction <maximumf>, %12, %cst_12 [1] : vector<128x256xf32> to vector<128xf32>
    %17 = vector.shape_cast %16 : vector<128xf32> to vector<128x1xf32>
    %18 = arith.maximumf %15, %17 : vector<128x1xf32>
    %19 = arith.maximumf %13, %18 : vector<128x1xf32>
    %20 = vector.broadcast %19 : vector<128x1xf32> to vector<128x256xf32>
    %21 = arith.subf %8, %20 : vector<128x256xf32>
    %22 = math.exp %21 : vector<128x256xf32>
    %cst_13 = arith.constant dense<0.000000e+00> : vector<128xf32>
    %23 = vector.multi_reduction <add>, %22, %cst_13 [1] : vector<128x256xf32> to vector<128xf32>
    %24 = vector.shape_cast %23 : vector<128xf32> to vector<128x1xf32>
    %25 = vector.broadcast %19 : vector<128x1xf32> to vector<128x256xf32>
    %26 = arith.subf %12, %25 : vector<128x256xf32>
    %27 = math.exp %26 : vector<128x256xf32>
    %cst_14 = arith.constant dense<0.000000e+00> : vector<128xf32>
    %28 = vector.multi_reduction <add>, %27, %cst_14 [1] : vector<128x256xf32> to vector<128xf32>
    %29 = vector.shape_cast %28 : vector<128xf32> to vector<128x1xf32>
    %30 = arith.addf %24, %29 : vector<128x1xf32>
    %31 = arith.subf %13, %19 : vector<128x1xf32>
    %32 = math.exp %31 : vector<128x1xf32>
    %c0_15 = arith.constant 0 : index
    %c0_16 = arith.constant 0 : index
    %33 = vector.load %arg9[%c0_15, %c0_16] : memref<128x1xf32, #tpu.memory_space<vmem>>, vector<128x1xf32>
    %34 = arith.mulf %32, %33 : vector<128x1xf32>
    %35 = arith.addf %34, %30 : vector<128x1xf32>
    %c0_17 = arith.constant 0 : index
    %c0_18 = arith.constant 0 : index
    %36 = vector.load %arg9[%c0_17, %c0_18] : memref<128x1xf32, #tpu.memory_space<vmem>>, vector<128x1xf32>
    tpu.vector_store %arg9[%c0_17, %c0_18], %35 {strides = array<i32>} : memref<128x1xf32, #tpu.memory_space<vmem>>, vector<128x1xf32>,
    %c0_19 = arith.constant 0 : index
    %c0_20 = arith.constant 0 : index
    %37 = vector.load %arg8[%c0_19, %c0_20] : memref<128x1xf32, #tpu.memory_space<vmem>>, vector<128x1xf32>
    tpu.vector_store %arg8[%c0_19, %c0_20], %19 {strides = array<i32>} : memref<128x1xf32, #tpu.memory_space<vmem>>, vector<128x1xf32>,
    %c0_i32_21 = arith.constant 0 : i32
    %38 = arith.cmpi eq, %arg1, %c0_i32_21 : i32
    %39 = arith.extui %38 : i1 to i32
    %c0_i32_22 = arith.constant 0 : i32
    %40 = arith.cmpi ne, %39, %c0_i32_22 : i32
    scf.if %40 {
      %c0_23 = arith.constant 0 : index
      %c0_24 = arith.constant 0 : index
      %41 = vector.load %arg5[%c0_23, %c0_24] : memref<128x1xf32, #tpu.memory_space<vmem>>, vector<128x1xf32>
      %c0_25 = arith.constant 0 : index
      %c0_26 = arith.constant 0 : index
      %42 = vector.load %arg8[%c0_25, %c0_26] : memref<128x1xf32, #tpu.memory_space<vmem>>, vector<128x1xf32>
      %43 = arith.addf %41, %42 : vector<128x1xf32>
      %c0_27 = arith.constant 0 : index
      %c0_28 = arith.constant 0 : index
      %44 = vector.load %arg9[%c0_27, %c0_28] : memref<128x1xf32, #tpu.memory_space<vmem>>, vector<128x1xf32>
      %45 = math.log %44 : vector<128x1xf32>
      %46 = arith.addf %43, %45 : vector<128x1xf32>
      %c0_29 = arith.constant 0 : index
      %c0_30 = arith.constant 0 : index
      %47 = vector.load %arg7[%c0_29, %c0_30] : memref<128x1xf32, #tpu.memory_space<vmem>>, vector<128x1xf32>
      tpu.vector_store %arg7[%c0_29, %c0_30], %46 {strides = array<i32>} : memref<128x1xf32, #tpu.memory_space<vmem>>, vector<128x1xf32>,
    } else {
    }
    return
  }
  func.func @transform_0(%arg0: i32, %arg1: i32) -> (i32, i32) {
    %c0_i32 = arith.constant 0 : i32
    %c0_i32_0 = arith.constant 0 : i32
    return %arg0, %c0_i32 : i32, i32
  }
  func.func @transform_1(%arg0: i32, %arg1: i32) -> (i32, i32) {
    %c0_i32 = arith.constant 0 : i32
    %c0_i32_0 = arith.constant 0 : i32
    return %arg1, %c0_i32 : i32, i32
  }
  func.func @transform_2(%arg0: i32, %arg1: i32) -> (i32, i32) {
    %c0_i32 = arith.constant 0 : i32
    %c0_i32_0 = arith.constant 0 : i32
    return %arg1, %c0_i32 : i32, i32
  }
  func.func @transform_3(%arg0: i32, %arg1: i32) -> (i32, i32) {
    %c0_i32 = arith.constant 0 : i32
    %c0_i32_0 = arith.constant 0 : i32
    return %arg0, %c0_i32 : i32, i32
  }
  func.func @transform_4(%arg0: i32, %arg1: i32) -> (i32, i32) {
    %c0_i32 = arith.constant 0 : i32
    %c0_i32_0 = arith.constant 0 : i32
    return %c0_i32, %arg1 : i32, i32
  }
  func.func @transform_5(%arg0: i32, %arg1: i32) -> (i32, i32) {
    %c0_i32 = arith.constant 0 : i32
    %c0_i32_0 = arith.constant 0 : i32
    return %arg0, %c0_i32 : i32, i32
  }
}

</mosaic_0001>

<llo_original>
// kernel: tpu_custom_call.1
$region0: #{tpu_custom_call.1}
  #allocation0 [shape = 'u32[]', space=smem, size = 0x4, offset = 0x4, fixed_abs, tag = 'smem constant byte address 0x4 - core index']
  #allocation1 [shape = 'u32[144,128]{1,0:T(1,128)}', space=vmem, size = 0x12000, scoped, tag = 'internal scratch']
  #allocation2 [shape = 'f32[128,1]{1,0:T(8,128)}', space=vmem, size = 0x10000, scoped, tag = 'scratch operand']
  #allocation3 [shape = 'f32[128,1]{1,0:T(8,128)}', space=vmem, size = 0x10000, scoped, tag = 'scratch operand']
  %s0 = inlined_call_operand.vmem [shape: bf16[256,128], index: 0, kind: input, shape index: {}]
  %s1 = inlined_call_operand.vmem [shape: bf16[256,128], index: 1, kind: input, shape index: {}]
  %s2 = inlined_call_operand.hbm [shape: bf16[256,128], index: 2, kind: input, shape index: {}]
  %s3 = inlined_call_operand.vmem [shape: f32[256,1], index: 3, kind: input, shape index: {}]
  %s4 = inlined_call_operand.vmem [shape: f32[1,256], index: 4, kind: input, shape index: {}]
  %s5 = inlined_call_operand.vmem [shape: f32[256,1], index: 5, kind: output, shape index: {}]
  %s6 = sld [smem:[#allocation0]]
  $region65: #{tpu_custom_call.1} parent=0
    _
  %s8 = ssub.s32 1, %s6
  %s9 = scalar_select 0, %s8, %s6
  $region1: #{tpu_custom_call.1} parent=0
    #allocation4 [shape = 'u8[65536]{0}', space=vmem, size = 0x10000, scoped, tag = 'input window, operand 2, single buffered']
    #allocation5 [shape = 's32[2]{0}', space=sflag, size = 0x8, scoped, tag = 'scoped memory for tpu_custom_call.1']
    %10 = vsyncpa [#allocation5], 0
    loop: start=0, step=1, limit=4
    $region2: #{tpu_custom_call.1} parent=1 // loop_pre_header
      _
    $region3: #{tpu_custom_call.1} parent=1 // loop_header
      %s12 = sphi 0, %s16
      %p13 = scmp.ge.s32.totalorder %s12, 4
      %s19 = sphi 0, %s31
      %s20 = sphi 0, %s27
      %s21 = sphi 0, %s19
      %s22 = sphi 0, %s20
      %s23 = sphi 0, %s21
      %s24 = sphi 0, %s22
      %s34 = sphi 0, %s36
      %s37 = sphi 0, %s34
      %s38 = sphi 0, %s37
      %s54 = sphi 0, %s38
      %s60 = sphi 0, %s62
      %s63 = sphi 0, %s60
      %s64 = sphi 0, %s63
      %s80 = sphi 0, %s64
      %s86 = sphi 0, %s88
      %s89 = sphi 0, %s86
      %s90 = sphi 0, %s89
      %s106 = sphi 0, %s90
      %s112 = sphi 0, %s114
      %s115 = sphi 0, %s112
      %s116 = sphi 0, %s115
      %s132 = sphi 0, %s116
      %s138 = sphi 0, %s140
      %s141 = sphi 0, %s138
      %s142 = sphi 0, %s141
      %s158 = sphi 0, %s142
      %s164 = sphi 0, %s166
      %s167 = sphi 0, %s164
      %s168 = sphi 0, %s167
      %s184 = sphi 0, %s168
    $region4: #{tpu_custom_call.1} parent=1 // loop_header_branch
      %15 = sbr.rel (%p13) target = $region8
    $region5: #{tpu_custom_call.1} parent=1 // loop_body
      %s17 = ssub.s32 %s12, 1
      %s18 = ssub.s32 %s12, 2
      %s25 = sadd.s32 1, %s20
      %p26 = scmp.ge.s32.totalorder %s25, 1
      %s27 = scalar_select %p26, 0, %s25
      %s28 = sadd.s32 1, %s19
      %s29 = scalar_select %p26, %s28, %s19
      %p30 = scmp.ge.s32.totalorder %s29, 2
      %s31 = scalar_select %p30, 0, %s29
      %s32 = ssub.s32 %s19, %s31
      %p33 = scmp.eq.s32.totalorder %s32, 0
      %s35 = sadd.s32 %s34, 1
      %s36 = scalar_select %p33, %s34, %s35
      %p39 = pneg %p33
      %p40 = scmp.eq.s32.totalorder %s12, 1
      %p41 = por %p39, %p40
      %p42 = scmp.ne.s32.totalorder %s34, %s37
      %p43 = scmp.eq.s32.totalorder %s12, 0
      %p44 = por %p42, %p43
      %p45 = scmp.ne.s32.totalorder %s34, %s37
      %p46 = scmp.eq.s32.totalorder %s17, 1
      %p47 = por %p45, %p46
      %p48 = scmp.ne.s32.totalorder %s37, %s38
      %p49 = scmp.eq.s32.totalorder %s17, 0
      %p50 = por %p48, %p49
      %p51 = scmp.ne.s32.totalorder %s37, %s38
      %p52 = scmp.eq.s32.totalorder %s18, 1
      %p53 = por %p51, %p52
      %p55 = scmp.ne.s32.totalorder %s38, %s54
      %p56 = scmp.eq.s32.totalorder %s18, 0
      %p57 = por %p55, %p56
      %s58 = ssub.s32 %s20, %s27
      %p59 = scmp.eq.s32.totalorder %s58, 0
      %s61 = sadd.s32 %s60, 1
      %s62 = scalar_select %p59, %s60, %s61
      %p65 = pneg %p59
      %p66 = scmp.eq.s32.totalorder %s12, 1
      %p67 = por %p65, %p66
      %p68 = scmp.ne.s32.totalorder %s60, %s63
      %p69 = scmp.eq.s32.totalorder %s12, 0
      %p70 = por %p68, %p69
      %p71 = scmp.ne.s32.totalorder %s60, %s63
      %p72 = scmp.eq.s32.totalorder %s17, 1
      %p73 = por %p71, %p72
      %p74 = scmp.ne.s32.totalorder %s63, %s64
      %p75 = scmp.eq.s32.totalorder %s17, 0
      %p76 = por %p74, %p75
      %p77 = scmp.ne.s32.totalorder %s63, %s64
      %p78 = scmp.eq.s32.totalorder %s18, 1
      %p79 = por %p77, %p78
      %p81 = scmp.ne.s32.totalorder %s64, %s80
      %p82 = scmp.eq.s32.totalorder %s18, 0
      %p83 = por %p81, %p82
      %s84 = ssub.s32 %s20, %s27
      %p85 = scmp.eq.s32.totalorder %s84, 0
      %s87 = sadd.s32 %s86, 1
      %s88 = scalar_select %p85, %s86, %s87
      %p91 = pneg %p85
      %p92 = scmp.eq.s32.totalorder %s12, 1
      %p93 = por %p91, %p92
      %p94 = scmp.ne.s32.totalorder %s86, %s89
      %p95 = scmp.eq.s32.totalorder %s12, 0
      %p96 = por %p94, %p95
      %p97 = scmp.ne.s32.totalorder %s86, %s89
      %p98 = scmp.eq.s32.totalorder %s17, 1
      %p99 = por %p97, %p98
      %p100 = scmp.ne.s32.totalorder %s89, %s90
      %p101 = scmp.eq.s32.totalorder %s17, 0
      %p102 = por %p100, %p101
      %p103 = scmp.ne.s32.totalorder %s89, %s90
      %p104 = scmp.eq.s32.totalorder %s18, 1
      %p105 = por %p103, %p104
      %p107 = scmp.ne.s32.totalorder %s90, %s106
      %p108 = scmp.eq.s32.totalorder %s18, 0
      %p109 = por %p107, %p108
      %s110 = ssub.s32 %s19, %s31
      %p111 = scmp.eq.s32.totalorder %s110, 0
      %s113 = sadd.s32 %s112, 1
      %s114 = scalar_select %p111, %s112, %s113
      %p117 = pneg %p111
      %p118 = scmp.eq.s32.totalorder %s12, 1
      %p119 = por %p117, %p118
      %p120 = scmp.ne.s32.totalorder %s112, %s115
      %p121 = scmp.eq.s32.totalorder %s12, 0
      %p122 = por %p120, %p121
      %p123 = scmp.ne.s32.totalorder %s112, %s115
      %p124 = scmp.eq.s32.totalorder %s17, 1
      %p125 = por %p123, %p124
      %p126 = scmp.ne.s32.totalorder %s115, %s116
      %p127 = scmp.eq.s32.totalorder %s17, 0
      %p128 = por %p126, %p127
      %p129 = scmp.ne.s32.totalorder %s115, %s116
      %p130 = scmp.eq.s32.totalorder %s18, 1
      %p131 = por %p129, %p130
      %p133 = scmp.ne.s32.totalorder %s116, %s132
      %p134 = scmp.eq.s32.totalorder %s18, 0
      %p135 = por %p133, %p134
      %s136 = ssub.s32 %s20, %s27
      %p137 = scmp.eq.s32.totalorder %s136, 0
      %s139 = sadd.s32 %s138, 1
      %s140 = scalar_select %p137, %s138, %s139
      %p143 = pneg %p137
      %p144 = scmp.eq.s32.totalorder %s12, 1
      %p145 = por %p143, %p144
      %p146 = scmp.ne.s32.totalorder %s138, %s141
      %p147 = scmp.eq.s32.totalorder %s12, 0
      %p148 = por %p146, %p147
      %p149 = scmp.ne.s32.totalorder %s138, %s141
      %p150 = scmp.eq.s32.totalorder %s17, 1
      %p151 = por %p149, %p150
      %p152 = scmp.ne.s32.totalorder %s141, %s142
      %p153 = scmp.eq.s32.totalorder %s17, 0
      %p154 = por %p152, %p153
      %p155 = scmp.ne.s32.totalorder %s141, %s142
      %p156 = scmp.eq.s32.totalorder %s18, 1
      %p157 = por %p155, %p156
      %p159 = scmp.ne.s32.totalorder %s142, %s158
      %p160 = scmp.eq.s32.totalorder %s18, 0
      %p161 = por %p159, %p160
      %s162 = ssub.s32 %s19, %s31
      %p163 = scmp.eq.s32.totalorder %s162, 0
      %s165 = sadd.s32 %s164, 1
      %s166 = scalar_select %p163, %s164, %s165
      %p169 = pneg %p163
      %p170 = scmp.eq.s32.totalorder %s12, 1
      %p171 = por %p169, %p170
      %p172 = scmp.ne.s32.totalorder %s164, %s167
      %p173 = scmp.eq.s32.totalorder %s12, 0
      %p174 = por %p172, %p173
      %p175 = scmp.ne.s32.totalorder %s164, %s167
      %p176 = scmp.eq.s32.totalorder %s17, 1
      %p177 = por %p175, %p176
      %p178 = scmp.ne.s32.totalorder %s167, %s168
      %p179 = scmp.eq.s32.totalorder %s17, 0
      %p180 = por %p178, %p179
      %p181 = scmp.ne.s32.totalorder %s167, %s168
      %p182 = scmp.eq.s32.totalorder %s18, 1
      %p183 = por %p181, %p182
      %p185 = scmp.ne.s32.totalorder %s168, %s184
      %p186 = scmp.eq.s32.totalorder %s18, 0
      %p187 = por %p185, %p186
      %p188 = scmp.le.s32.totalorder 1, %s12
      %p189 = scmp.lt.s32.totalorder %s12, 3
      %p190 = pnand %p188, %p189
      %p191 = pneg %p190
      // Predicated region
      $region9: #{tpu_custom_call.1} parent=5 // pred_check
        _
      $region10: #{tpu_custom_call.1} parent=5 // pred_check_branch
        %193 = sbr.rel (%p190) target = $region12
      $region11: #{tpu_custom_call.1} parent=5 // pred_region
        %s194 = ssub.s32 %s12, 1
        // Predicated region
        $region13: #{tpu_custom_call.1} parent=11 // pred_check
          %p195 = pneg %p76
        $region14: #{tpu_custom_call.1} parent=11 // pred_check_branch
          %197 = sbr.rel (%p195) target = $region16
        $region15: #{tpu_custom_call.1} parent=11 // pred_region
          %s198 = smul.u32 32, %s22
          %p199 = scmp.lt.s32.totalorder %s198, 31
          %s200 = scalar_select %p199, %s198, 31
          %s201 = smul.addr %s200, 4
          %s202 = scalar_lea.vmem %s1, %s201
          %s203 = smul.u32 32, %s22
        $region16: #{tpu_custom_call.1} parent=11 // pred_fallthru
          _
        // Predicated region
        $region17: #{tpu_custom_call.1} parent=11 // pred_check
          %p204 = pneg %p102
        $region18: #{tpu_custom_call.1} parent=11 // pred_check_branch
          %206 = sbr.rel (%p204) target = $region20
        $region19: #{tpu_custom_call.1} parent=11 // pred_region
          %s207 = smul.u32 32, %s22
          %s209 = ssub.s32 2048, 2048
          %210 = vsyncadd [#allocation5], %s209
          %s211 = smul.addr %s207, 64
          %s212 = scalar_lea.hbm %s2, %s211
          %s213 = sshll.u32 [#allocation4], 4
          %s214 = int_to_ptr.vmem [resolvable:$true] %s213
          %219 = dma.hbm_to_vmem [thread:$0]  %s212, 2048, %s214, [#allocation5], 64, 64, 4
        $region20: #{tpu_custom_call.1} parent=11 // pred_fallthru
          _
        // Predicated region
        $region21: #{tpu_custom_call.1} parent=11 // pred_check
          %p220 = pneg %p154
        $region22: #{tpu_custom_call.1} parent=11 // pred_check_branch
          %222 = sbr.rel (%p220) target = $region24
        $region23: #{tpu_custom_call.1} parent=11 // pred_region
          %s223 = smul.u32 2, %s22
          %p224 = scmp.lt.s32.totalorder %s223, 1
          %s225 = scalar_select %p224, %s223, 1
          %s226 = scalar_lea.vmem %s4, %s225
          %s227 = smul.u32 2, %s22
        $region24: #{tpu_custom_call.1} parent=11 // pred_fallthru
          _
      $region12: #{tpu_custom_call.1} parent=5 // pred_fallthru
        _
      %p228 = scmp.lt.s32.totalorder %s12, 2
      // Predicated region
      $region25: #{tpu_custom_call.1} parent=5 // pred_check
        %p229 = pneg %p228
      $region26: #{tpu_custom_call.1} parent=5 // pred_check_branch
        %231 = sbr.rel (%p229) target = $region28
      $region27: #{tpu_custom_call.1} parent=5 // pred_region
        // Predicated region
        $region29: #{tpu_custom_call.1} parent=27 // pred_check
          %p232 = pneg %p44
        $region30: #{tpu_custom_call.1} parent=27 // pred_check_branch
          %234 = sbr.rel (%p232) target = $region32
        $region31: #{tpu_custom_call.1} parent=27 // pred_region
          %s235 = smul.u32 16, %s19
          %p236 = scmp.lt.s32.totalorder %s235, 31
          %s237 = scalar_select %p236, %s235, 31
          %s238 = smul.addr %s237, 4
          %s239 = scalar_lea.vmem %s0, %s238
          %s240 = smul.u32 16, %s19
        $region32: #{tpu_custom_call.1} parent=27 // pred_fallthru
          _
        // Predicated region
        $region33: #{tpu_custom_call.1} parent=27 // pred_check
          %p241 = pneg %p122
        $region34: #{tpu_custom_call.1} parent=27 // pred_check_branch
          %243 = sbr.rel (%p241) target = $region36
        $region35: #{tpu_custom_call.1} parent=27 // pred_region
          %s244 = smul.u32 16, %s19
          %p245 = scmp.lt.s32.totalorder %s244, 31
          %s246 = scalar_select %p245, %s244, 31
          %s247 = smul.addr %s246, 8
          %s248 = scalar_lea.vmem %s3, %s247
          %s249 = smul.u32 16, %s19
        $region36: #{tpu_custom_call.1} parent=27 // pred_fallthru
          _
      $region28: #{tpu_custom_call.1} parent=5 // pred_fallthru
        _
      %p250 = scmp.le.s32.totalorder 1, %s12
      %p251 = scmp.lt.s32.totalorder %s12, 3
      %p252 = pnand %p250, %p251
      %p253 = pneg %p252
      // Predicated region
      $region37: #{tpu_custom_call.1} parent=5 // pred_check
        _
      $region38: #{tpu_custom_call.1} parent=5 // pred_check_branch
        %255 = sbr.rel (%p252) target = $region40
      $region39: #{tpu_custom_call.1} parent=5 // pred_region
        %s256 = ssub.s32 %s12, 1
        // Predicated region
        $region41: #{tpu_custom_call.1} parent=39 // pred_check
          %p257 = pneg %p102
        $region42: #{tpu_custom_call.1} parent=39 // pred_check_branch
          %259 = sbr.rel (%p257) target = $region44
        $region43: #{tpu_custom_call.1} parent=39 // pred_region
          %260 = dma.done [#allocation5], 2048
        $region44: #{tpu_custom_call.1} parent=39 // pred_fallthru
          _
        %s261 = smul.u32 16, %s21
        %p262 = scmp.lt.s32.totalorder %s261, 31
        %s263 = scalar_select %p262, %s261, 31
        %s264 = smul.addr %s263, 4
        %s265 = scalar_lea.vmem %s0, %s264
        %p266 = pneg %p50
        %p267 = pneg %p47
        %s268 = smul.u32 32, %s22
        %p269 = scmp.lt.s32.totalorder %s268, 31
        %s270 = scalar_select %p269, %s268, 31
        %s271 = smul.addr %s270, 4
        %s272 = scalar_lea.vmem %s1, %s271
        %p273 = pneg %p76
        %p274 = pneg %p73
        %p275 = pneg %p102
        %p276 = pneg %p99
        %s277 = smul.u32 16, %s21
        %p278 = scmp.lt.s32.totalorder %s277, 31
        %s279 = scalar_select %p278, %s277, 31
        %s280 = smul.addr %s279, 8
        %s281 = scalar_lea.vmem %s3, %s280
        %p282 = pneg %p128
        %p283 = pneg %p125
        %s284 = smul.u32 2, %s22
        %p285 = scmp.lt.s32.totalorder %s284, 1
        %s286 = scalar_select %p285, %s284, 1
        %s287 = scalar_lea.vmem %s4, %s286
        %p288 = pneg %p154
        %p289 = pneg %p151
        %p290 = pneg %p180
        %p291 = pneg %p177
        %s292 = smul.u32 16, %s21
        %p293 = scmp.lt.s32.totalorder %s292, 31
        %s294 = scalar_select %p293, %s292, 31
        %s295 = smul.addr %s294, 8
        %s296 = scalar_lea.vmem %s5, %s295
        %s297 = smul.u32 16, %s21
        %p298 = scmp.lt.s32.totalorder %s297, 31
        %s299 = scalar_select %p298, %s297, 31
        %s300 = smul.addr %s299, 4
        %s301 = scalar_lea.vmem %s0, %s300
        %s302 = smul.u32 16, %s21
        %s303 = smul.u32 32, %s22
        %p304 = scmp.lt.s32.totalorder %s303, 31
        %s305 = scalar_select %p304, %s303, 31
        %s306 = smul.addr %s305, 4
        %s307 = scalar_lea.vmem %s1, %s306
        %s308 = smul.u32 32, %s22
        %s309 = smul.u32 32, %s22
        %s310 = smul.u32 16, %s21
        %p311 = scmp.lt.s32.totalorder %s310, 31
        %s312 = scalar_select %p311, %s310, 31
        %s313 = smul.addr %s312, 8
        %s314 = scalar_lea.vmem %s3, %s313
        %s315 = smul.u32 16, %s21
        %s316 = smul.u32 2, %s22
        %p317 = scmp.lt.s32.totalorder %s316, 1
        %s318 = scalar_select %p317, %s316, 1
        %s319 = scalar_lea.vmem %s4, %s318
        %s320 = smul.u32 2, %s22
        %s321 = smul.u32 16, %s21
        %p322 = scmp.lt.s32.totalorder %s321, 31
        %s323 = scalar_select %p322, %s321, 31
        %s324 = smul.addr %s323, 8
        %s325 = scalar_lea.vmem %s5, %s324
        %s326 = smul.u32 16, %s21
        %p328 = scmp.eq.s32.totalorder %s22, 0
        // Predicated region
        $region45: #{tpu_custom_call.1} parent=39 // pred_check
          %p329 = pneg %p328
        $region46: #{tpu_custom_call.1} parent=39 // pred_check_branch
          %331 = sbr.rel (%p329) target = $region48
        $region47: #{tpu_custom_call.1} parent=39 // pred_region
          %vm332 = vcmask 7168
          %333 = vst.msk [vmem:[#allocation2] sm:$0xff] %vm332, -1e+30
          %334 = vst.msk [vmem:[#allocation2 + $0x8] sm:$0xff] %vm332, -1e+30
          %335 = vst.msk [vmem:[#allocation2 + $0x10] sm:$0xff] %vm332, -1e+30
          %336 = vst.msk [vmem:[#allocation2 + $0x18] sm:$0xff] %vm332, -1e+30
          %337 = vst.msk [vmem:[#allocation2 + $0x20] sm:$0xff] %vm332, -1e+30
          %338 = vst.msk [vmem:[#allocation2 + $0x28] sm:$0xff] %vm332, -1e+30
          %339 = vst.msk [vmem:[#allocation2 + $0x30] sm:$0xff] %vm332, -1e+30
          %340 = vst.msk [vmem:[#allocation2 + $0x38] sm:$0xff] %vm332, -1e+30
          %341 = vst.msk [vmem:[#allocation2 + $0x40] sm:$0xff] %vm332, -1e+30
          %342 = vst.msk [vmem:[#allocation2 + $0x48] sm:$0xff] %vm332, -1e+30
          %343 = vst.msk [vmem:[#allocation2 + $0x50] sm:$0xff] %vm332, -1e+30
          %344 = vst.msk [vmem:[#allocation2 + $0x58] sm:$0xff] %vm332, -1e+30
          %345 = vst.msk [vmem:[#allocation2 + $0x60] sm:$0xff] %vm332, -1e+30
          %346 = vst.msk [vmem:[#allocation2 + $0x68] sm:$0xff] %vm332, -1e+30
          %347 = vst.msk [vmem:[#allocation2 + $0x70] sm:$0xff] %vm332, -1e+30
          %348 = vst.msk [vmem:[#allocation2 + $0x78] sm:$0xff] %vm332, -1e+30
          %349 = vst.msk [vmem:[#allocation3] sm:$0xff] %vm332, 0.0
          %350 = vst.msk [vmem:[#allocation3 + $0x8] sm:$0xff] %vm332, 0.0
          %351 = vst.msk [vmem:[#allocation3 + $0x10] sm:$0xff] %vm332, 0.0
          %352 = vst.msk [vmem:[#allocation3 + $0x18] sm:$0xff] %vm332, 0.0
          %353 = vst.msk [vmem:[#allocation3 + $0x20] sm:$0xff] %vm332, 0.0
          %354 = vst.msk [vmem:[#allocation3 + $0x28] sm:$0xff] %vm332, 0.0
          %355 = vst.msk [vmem:[#allocation3 + $0x30] sm:$0xff] %vm332, 0.0
          %356 = vst.msk [vmem:[#allocation3 + $0x38] sm:$0xff] %vm332, 0.0
          %357 = vst.msk [vmem:[#allocation3 + $0x40] sm:$0xff] %vm332, 0.0
          %358 = vst.msk [vmem:[#allocation3 + $0x48] sm:$0xff] %vm332, 0.0
          %359 = vst.msk [vmem:[#allocation3 + $0x50] sm:$0xff] %vm332, 0.0
          %360 = vst.msk [vmem:[#allocation3 + $0x58] sm:$0xff] %vm332, 0.0
          %361 = vst.msk [vmem:[#allocation3 + $0x60] sm:$0xff] %vm332, 0.0
          %362 = vst.msk [vmem:[#allocation3 + $0x68] sm:$0xff] %vm332, 0.0
          %363 = vst.msk [vmem:[#allocation3 + $0x70] sm:$0xff] %vm332, 0.0
          %364 = vst.msk [vmem:[#allocation3 + $0x78] sm:$0xff] %vm332, 0.0
        $region48: #{tpu_custom_call.1} parent=39 // pred_fallthru
          _
        %v365 = vld [vmem:[%s301] sm:$0xf]
        %v366 = vld [vmem:[%s301 + $0x4] sm:$0xf]
        %v367 = vld [vmem:[%s301 + $0x8] sm:$0xf]
        %v368 = vld [vmem:[%s301 + $0xc] sm:$0xf]
        %v369 = vld [vmem:[%s301 + $0x10] sm:$0xf]
        %v370 = vld [vmem:[%s301 + $0x14] sm:$0xf]
        %v371 = vld [vmem:[%s301 + $0x18] sm:$0xf]
        %v372 = vld [vmem:[%s301 + $0x1c] sm:$0xf]
        %v373 = vld [vmem:[%s301 + $0x20] sm:$0xf]
        %v374 = vld [vmem:[%s301 + $0x24] sm:$0xf]
        %v375 = vld [vmem:[%s301 + $0x28] sm:$0xf]
        %v376 = vld [vmem:[%s301 + $0x2c] sm:$0xf]
        %v377 = vld [vmem:[%s301 + $0x30] sm:$0xf]
        %v378 = vld [vmem:[%s301 + $0x34] sm:$0xf]
        %v379 = vld [vmem:[%s301 + $0x38] sm:$0xf]
        %v380 = vld [vmem:[%s301 + $0x3c] sm:$0xf]
        %v381 = vld [vmem:[%s319] sm:$0x3]
        %v382 = vld [vmem:[%s307] sm:$0xf]
        %v383 = vld [vmem:[%s307 + $0x4] sm:$0xf]
        %v384 = vld [vmem:[%s307 + $0x8] sm:$0xf]
        %v385 = vld [vmem:[%s307 + $0xc] sm:$0xf]
        %v386 = vld [vmem:[%s307 + $0x10] sm:$0xf]
        %v387 = vld [vmem:[%s307 + $0x14] sm:$0xf]
        %v388 = vld [vmem:[%s307 + $0x18] sm:$0xf]
        %v389 = vld [vmem:[%s307 + $0x1c] sm:$0xf]
        %v390 = vld [vmem:[%s307 + $0x20] sm:$0xf]
        %v391 = vld [vmem:[%s307 + $0x24] sm:$0xf]
        %v392 = vld [vmem:[%s307 + $0x28] sm:$0xf]
        %v393 = vld [vmem:[%s307 + $0x2c] sm:$0xf]
        %v394 = vld [vmem:[%s307 + $0x30] sm:$0xf]
        %v395 = vld [vmem:[%s307 + $0x34] sm:$0xf]
        %v396 = vld [vmem:[%s307 + $0x38] sm:$0xf]
        %v397 = vld [vmem:[%s307 + $0x3c] sm:$0xf]
        %v398 = vld [vmem:[%s307 + $0x40] sm:$0xf]
        %v399 = vld [vmem:[%s307 + $0x44] sm:$0xf]
        %v400 = vld [vmem:[%s307 + $0x48] sm:$0xf]
        %v401 = vld [vmem:[%s307 + $0x4c] sm:$0xf]
        %v402 = vld [vmem:[%s307 + $0x50] sm:$0xf]
        %v403 = vld [vmem:[%s307 + $0x54] sm:$0xf]
        %v404 = vld [vmem:[%s307 + $0x58] sm:$0xf]
        %v405 = vld [vmem:[%s307 + $0x5c] sm:$0xf]
        %v406 = vld [vmem:[%s307 + $0x60] sm:$0xf]
        %v407 = vld [vmem:[%s307 + $0x64] sm:$0xf]
        %v408 = vld [vmem:[%s307 + $0x68] sm:$0xf]
        %v409 = vld [vmem:[%s307 + $0x6c] sm:$0xf]
        %v410 = vld [vmem:[%s307 + $0x70] sm:$0xf]
        %v411 = vld [vmem:[%s307 + $0x74] sm:$0xf]
        %v412 = vld [vmem:[%s307 + $0x78] sm:$0xf]
        %v413 = vld [vmem:[%s307 + $0x7c] sm:$0xf]
        %v415 = vlaneseq
        %v416 = vshrl.u32 %v415, 7
        %v417 = vsub.s32 0, %v416
        %v418 = vrot.slane %v381, %v417
        %v419 = vlaneseq
        %v420 = vshrl.u32 %v419, 7
        %v421 = vsub.s32 1, %v420
        %v422 = vrot.slane %v381, %v421
        %v441 = vunpack.c.l.b16 %v365
        %v442 = vunpack.c.l.b16 %v366
        %v443 = vunpack.c.l.b16 %v367
        %v444 = vunpack.c.l.b16 %v368
        %v445 = vunpack.c.l.b16 %v369
        %v446 = vunpack.c.l.b16 %v370
        %v447 = vunpack.c.l.b16 %v371
        %v448 = vunpack.c.l.b16 %v372
        %v449 = vunpack.c.l.b16 %v373
        %v450 = vunpack.c.l.b16 %v374
        %v451 = vunpack.c.l.b16 %v375
        %v452 = vunpack.c.l.b16 %v376
        %v453 = vunpack.c.l.b16 %v377
        %v454 = vunpack.c.l.b16 %v378
        %v455 = vunpack.c.l.b16 %v379
        %v456 = vunpack.c.l.b16 %v380
        %v457 = vpack.c.b16 %v442, %v441
        %v458 = vpack.c.b16 %v444, %v443
        %v459 = vpack.c.b16 %v446, %v445
        %v460 = vpack.c.b16 %v448, %v447
        %v461 = vpack.c.b16 %v450, %v449
        %v462 = vpack.c.b16 %v452, %v451
        %v463 = vpack.c.b16 %v454, %v453
        %v464 = vpack.c.b16 %v456, %v455
        %v505 = vunpack.c.l.b16 %v382
        %v506 = vunpack.c.l.b16 %v383
        %v507 = vunpack.c.l.b16 %v384
        %v508 = vunpack.c.l.b16 %v385
        %v509 = vunpack.c.l.b16 %v386
        %v510 = vunpack.c.l.b16 %v387
        %v511 = vunpack.c.l.b16 %v388
        %v512 = vunpack.c.l.b16 %v389
        %v513 = vunpack.c.l.b16 %v390
        %v514 = vunpack.c.l.b16 %v391
        %v515 = vunpack.c.l.b16 %v392
        %v516 = vunpack.c.l.b16 %v393
        %v517 = vunpack.c.l.b16 %v394
        %v518 = vunpack.c.l.b16 %v395
        %v519 = vunpack.c.l.b16 %v396
        %v520 = vunpack.c.l.b16 %v397
        %v521 = vunpack.c.l.b16 %v398
        %v522 = vunpack.c.l.b16 %v399
        %v523 = vunpack.c.l.b16 %v400
        %v524 = vunpack.c.l.b16 %v401
        %v525 = vunpack.c.l.b16 %v402
        %v526 = vunpack.c.l.b16 %v403
        %v527 = vunpack.c.l.b16 %v404
        %v528 = vunpack.c.l.b16 %v405
        %v529 = vunpack.c.l.b16 %v406
        %v530 = vunpack.c.l.b16 %v407
        %v531 = vunpack.c.l.b16 %v408
        %v532 = vunpack.c.l.b16 %v409
        %v533 = vunpack.c.l.b16 %v410
        %v534 = vunpack.c.l.b16 %v411
        %v535 = vunpack.c.l.b16 %v412
        %v536 = vunpack.c.l.b16 %v413
        %v537 = vpack.c.b16 %v506, %v505
        %v538 = vpack.c.b16 %v508, %v507
        %v539 = vpack.c.b16 %v510, %v509
        %v540 = vpack.c.b16 %v512, %v511
        %v541 = vpack.c.b16 %v514, %v513
        %v542 = vpack.c.b16 %v516, %v515
        %v543 = vpack.c.b16 %v518, %v517
        %v544 = vpack.c.b16 %v520, %v519
        %v545 = vpack.c.b16 %v522, %v521
        %v546 = vpack.c.b16 %v524, %v523
        %v547 = vpack.c.b16 %v526, %v525
        %v548 = vpack.c.b16 %v528, %v527
        %v549 = vpack.c.b16 %v530, %v529
        %v550 = vpack.c.b16 %v532, %v531
        %v551 = vpack.c.b16 %v534, %v533
        %v552 = vpack.c.b16 %v536, %v535
        %569 = vmatprep.subr.bf16.mxu0 0
        %570 = vmatpush1.bf16.xpose.msra.mxu0 %v537
        %571 = vmatprep.subr.bf16.mxu0 0
        %572 = vmatpush1.bf16.xpose.msra.mxu0 %v538
        %573 = vmatprep.subr.bf16.mxu0 0
        %574 = vmatpush1.bf16.xpose.msra.mxu0 %v539
        %575 = vmatprep.subr.bf16.mxu0 0
        %576 = vmatpush1.bf16.xpose.msra.mxu0 %v540
        %577 = vmatprep.subr.bf16.mxu0 0
        %578 = vmatpush1.bf16.xpose.msra.mxu0 %v541
        %579 = vmatprep.subr.bf16.mxu0 0
        %580 = vmatpush1.bf16.xpose.msra.mxu0 %v542
        %581 = vmatprep.subr.bf16.mxu0 0
        %582 = vmatpush1.bf16.xpose.msra.mxu0 %v543
        %583 = vmatprep.subr.bf16.mxu0 0
        %584 = vmatpush1.bf16.xpose.msra.mxu0 %v544
        %585 = vmatprep.subr.bf16.mxu0 0
        %586 = vmatpush1.bf16.xpose.msra.mxu0 %v545
        %587 = vmatprep.subr.bf16.mxu0 0
        %588 = vmatpush1.bf16.xpose.msra.mxu0 %v546
        %589 = vmatprep.subr.bf16.mxu0 0
        %590 = vmatpush1.bf16.xpose.msra.mxu0 %v547
        %591 = vmatprep.subr.bf16.mxu0 0
        %592 = vmatpush1.bf16.xpose.msra.mxu0 %v548
        %593 = vmatprep.subr.bf16.mxu0 0
        %594 = vmatpush1.bf16.xpose.msra.mxu0 %v549
        %595 = vmatprep.subr.bf16.mxu0 0
        %596 = vmatpush1.bf16.xpose.msra.mxu0 %v550
        %597 = vmatprep.subr.bf16.mxu0 0
        %598 = vmatpush1.bf16.xpose.msra.mxu0 %v551
        %599 = vmatprep.subr.bf16.mxu0 0
        %600 = vmatpush1.bf16.xpose.msra.mxu0 %v552
        %601 = vmatprep.mubr.bf16.mxu0 0
        %602 = vmatmul.mubr.bf16.gmra.mrb[0].mxu0 %v457
        %v603 = vpop.f32.mrb[0].mxu0
        %v604 = vadd.f32 %v418, %v603
        %v605 = vpop.f32.mrb[0].mxu0
        %v606 = vadd.f32 %v422, %v605
        %v607 = vpop.f32.mrb[0].mxu0
        %v608 = vadd.f32 %v418, %v607
        %v609 = vpop.f32.mrb[0].mxu0
        %v610 = vadd.f32 %v422, %v609
        %611 = vmatprep.mubr.bf16.mxu0 0
        %612 = vmatmul.mubr.bf16.gmra.mrb[0].mxu0 %v458
        %v613 = vpop.f32.mrb[0].mxu0
        %v614 = vadd.f32 %v418, %v613
        %v615 = vpop.f32.mrb[0].mxu0
        %v616 = vadd.f32 %v422, %v615
        %v617 = vpop.f32.mrb[0].mxu0
        %v618 = vadd.f32 %v418, %v617
        %v619 = vpop.f32.mrb[0].mxu0
        %v620 = vadd.f32 %v422, %v619
        %621 = vmatprep.mubr.bf16.mxu0 0
        %622 = vmatmul.mubr.bf16.gmra.mrb[0].mxu0 %v459
        %v623 = vpop.f32.mrb[0].mxu0
        %v624 = vadd.f32 %v418, %v623
        %v625 = vpop.f32.mrb[0].mxu0
        %v626 = vadd.f32 %v422, %v625
        %v627 = vpop.f32.mrb[0].mxu0
        %v628 = vadd.f32 %v418, %v627
        %v629 = vpop.f32.mrb[0].mxu0
        %v630 = vadd.f32 %v422, %v629
        %631 = vmatprep.mubr.bf16.mxu0 0
        %632 = vmatmul.mubr.bf16.gmra.mrb[0].mxu0 %v460
        %v633 = vpop.f32.mrb[0].mxu0
        %v634 = vadd.f32 %v418, %v633
        %v635 = vpop.f32.mrb[0].mxu0
        %v636 = vadd.f32 %v422, %v635
        %v637 = vpop.f32.mrb[0].mxu0
        %v638 = vadd.f32 %v418, %v637
        %v639 = vpop.f32.mrb[0].mxu0
        %v640 = vadd.f32 %v422, %v639
        %641 = vmatprep.mubr.bf16.mxu0 0
        %642 = vmatmul.mubr.bf16.gmra.mrb[0].mxu0 %v461
        %v643 = vpop.f32.mrb[0].mxu0
        %v644 = vadd.f32 %v418, %v643
        %v645 = vpop.f32.mrb[0].mxu0
        %v646 = vadd.f32 %v422, %v645
        %v647 = vpop.f32.mrb[0].mxu0
        %v648 = vadd.f32 %v418, %v647
        %v649 = vpop.f32.mrb[0].mxu0
        %v650 = vadd.f32 %v422, %v649
        %651 = vmatprep.mubr.bf16.mxu0 0
        %652 = vmatmul.mubr.bf16.gmra.mrb[0].mxu0 %v462
        %v653 = vpop.f32.mrb[0].mxu0
        %v654 = vadd.f32 %v418, %v653
        %v655 = vpop.f32.mrb[0].mxu0
        %v656 = vadd.f32 %v422, %v655
        %v657 = vpop.f32.mrb[0].mxu0
        %v658 = vadd.f32 %v418, %v657
        %v659 = vpop.f32.mrb[0].mxu0
        %v660 = vadd.f32 %v422, %v659
        %661 = vmatprep.mubr.bf16.mxu0 0
        %662 = vmatmul.mubr.bf16.gmra.mrb[0].mxu0 %v463
        %v663 = vpop.f32.mrb[0].mxu0
        %v664 = vadd.f32 %v418, %v663
        %v665 = vpop.f32.mrb[0].mxu0
        %v666 = vadd.f32 %v422, %v665
        %v667 = vpop.f32.mrb[0].mxu0
        %v668 = vadd.f32 %v418, %v667
        %v669 = vpop.f32.mrb[0].mxu0
        %v670 = vadd.f32 %v422, %v669
        %671 = vmatprep.mubr.bf16.mxu0 0
        %672 = vmatmul.mubr.bf16.gmra.mrb[0].mxu0 %v464
        %v673 = vpop.f32.mrb[0].mxu0
        %v674 = vadd.f32 %v418, %v673
        %v675 = vpop.f32.mrb[0].mxu0
        %v676 = vadd.f32 %v422, %v675
        %v677 = vpop.f32.mrb[0].mxu0
        %v678 = vadd.f32 %v418, %v677
        %v679 = vpop.f32.mrb[0].mxu0
        %v680 = vadd.f32 %v422, %v679
        %681 = vdwg.mxu0
        %v682 = vld [vmem:[#allocation4] sm:$0xf]
        %v683 = vld [vmem:[#allocation4 + $0x4] sm:$0xf]
        %v684 = vld [vmem:[#allocation4 + $0x8] sm:$0xf]
        %v685 = vld [vmem:[#allocation4 + $0xc] sm:$0xf]
        %v686 = vld [vmem:[#allocation4 + $0x10] sm:$0xf]
        %v687 = vld [vmem:[#allocation4 + $0x14] sm:$0xf]
        %v688 = vld [vmem:[#allocation4 + $0x18] sm:$0xf]
        %v689 = vld [vmem:[#allocation4 + $0x1c] sm:$0xf]
        %v690 = vld [vmem:[#allocation4 + $0x20] sm:$0xf]
        %v691 = vld [vmem:[#allocation4 + $0x24] sm:$0xf]
        %v692 = vld [vmem:[#allocation4 + $0x28] sm:$0xf]
        %v693 = vld [vmem:[#allocation4 + $0x2c] sm:$0xf]
        %v694 = vld [vmem:[#allocation4 + $0x30] sm:$0xf]
        %v695 = vld [vmem:[#allocation4 + $0x34] sm:$0xf]
        %v696 = vld [vmem:[#allocation4 + $0x38] sm:$0xf]
        %v697 = vld [vmem:[#allocation4 + $0x3c] sm:$0xf]
        %v698 = vld [vmem:[#allocation4 + $0x40] sm:$0xf]
        %v699 = vld [vmem:[#allocation4 + $0x44] sm:$0xf]
        %v700 = vld [vmem:[#allocation4 + $0x48] sm:$0xf]
        %v701 = vld [vmem:[#allocation4 + $0x4c] sm:$0xf]
        %v702 = vld [vmem:[#allocation4 + $0x50] sm:$0xf]
        %v703 = vld [vmem:[#allocation4 + $0x54] sm:$0xf]
        %v704 = vld [vmem:[#allocation4 + $0x58] sm:$0xf]
        %v705 = vld [vmem:[#allocation4 + $0x5c] sm:$0xf]
        %v706 = vld [vmem:[#allocation4 + $0x60] sm:$0xf]
        %v707 = vld [vmem:[#allocation4 + $0x64] sm:$0xf]
        %v708 = vld [vmem:[#allocation4 + $0x68] sm:$0xf]
        %v709 = vld [vmem:[#allocation4 + $0x6c] sm:$0xf]
        %v710 = vld [vmem:[#allocation4 + $0x70] sm:$0xf]
        %v711 = vld [vmem:[#allocation4 + $0x74] sm:$0xf]
        %v712 = vld [vmem:[#allocation4 + $0x78] sm:$0xf]
        %v713 = vld [vmem:[#allocation4 + $0x7c] sm:$0xf]
        %v746 = vunpack.c.l.b16 %v682
        %v747 = vunpack.c.l.b16 %v683
        %v748 = vunpack.c.l.b16 %v684
        %v749 = vunpack.c.l.b16 %v685
        %v750 = vunpack.c.l.b16 %v686
        %v751 = vunpack.c.l.b16 %v687
        %v752 = vunpack.c.l.b16 %v688
        %v753 = vunpack.c.l.b16 %v689
        %v754 = vunpack.c.l.b16 %v690
        %v755 = vunpack.c.l.b16 %v691
        %v756 = vunpack.c.l.b16 %v692
        %v757 = vunpack.c.l.b16 %v693
        %v758 = vunpack.c.l.b16 %v694
        %v759 = vunpack.c.l.b16 %v695
        %v760 = vunpack.c.l.b16 %v696
        %v761 = vunpack.c.l.b16 %v697
        %v762 = vunpack.c.l.b16 %v698
        %v763 = vunpack.c.l.b16 %v699
        %v764 = vunpack.c.l.b16 %v700
        %v765 = vunpack.c.l.b16 %v701
        %v766 = vunpack.c.l.b16 %v702
        %v767 = vunpack.c.l.b16 %v703
        %v768 = vunpack.c.l.b16 %v704
        %v769 = vunpack.c.l.b16 %v705
        %v770 = vunpack.c.l.b16 %v706
        %v771 = vunpack.c.l.b16 %v707
        %v772 = vunpack.c.l.b16 %v708
        %v773 = vunpack.c.l.b16 %v709
        %v774 = vunpack.c.l.b16 %v710
        %v775 = vunpack.c.l.b16 %v711
        %v776 = vunpack.c.l.b16 %v712
        %v777 = vunpack.c.l.b16 %v713
        %v778 = vpack.c.b16 %v747, %v746
        %v779 = vpack.c.b16 %v749, %v748
        %v780 = vpack.c.b16 %v751, %v750
        %v781 = vpack.c.b16 %v753, %v752
        %v782 = vpack.c.b16 %v755, %v754
        %v783 = vpack.c.b16 %v757, %v756
        %v784 = vpack.c.b16 %v759, %v758
        %v785 = vpack.c.b16 %v761, %v760
        %v786 = vpack.c.b16 %v763, %v762
        %v787 = vpack.c.b16 %v765, %v764
        %v788 = vpack.c.b16 %v767, %v766
        %v789 = vpack.c.b16 %v769, %v768
        %v790 = vpack.c.b16 %v771, %v770
        %v791 = vpack.c.b16 %v773, %v772
        %v792 = vpack.c.b16 %v775, %v774
        %v793 = vpack.c.b16 %v777, %v776
        %810 = vmatprep.subr.bf16.mxu0 0
        %811 = vmatpush1.bf16.xpose.msra.mxu0 %v778
        %812 = vmatprep.subr.bf16.mxu0 0
        %813 = vmatpush1.bf16.xpose.msra.mxu0 %v779
        %814 = vmatprep.subr.bf16.mxu0 0
        %815 = vmatpush1.bf16.xpose.msra.mxu0 %v780
        %816 = vmatprep.subr.bf16.mxu0 0
        %817 = vmatpush1.bf16.xpose.msra.mxu0 %v781
        %818 = vmatprep.subr.bf16.mxu0 0
        %819 = vmatpush1.bf16.xpose.msra.mxu0 %v782
        %820 = vmatprep.subr.bf16.mxu0 0
        %821 = vmatpush1.bf16.xpose.msra.mxu0 %v783
        %822 = vmatprep.subr.bf16.mxu0 0
        %823 = vmatpush1.bf16.xpose.msra.mxu0 %v784
        %824 = vmatprep.subr.bf16.mxu0 0
        %825 = vmatpush1.bf16.xpose.msra.mxu0 %v785
        %826 = vmatprep.subr.bf16.mxu0 0
        %827 = vmatpush1.bf16.xpose.msra.mxu0 %v786
        %828 = vmatprep.subr.bf16.mxu0 0
        %829 = vmatpush1.bf16.xpose.msra.mxu0 %v787
        %830 = vmatprep.subr.bf16.mxu0 0
        %831 = vmatpush1.bf16.xpose.msra.mxu0 %v788
        %832 = vmatprep.subr.bf16.mxu0 0
        %833 = vmatpush1.bf16.xpose.msra.mxu0 %v789
        %834 = vmatprep.subr.bf16.mxu0 0
        %835 = vmatpush1.bf16.xpose.msra.mxu0 %v790
        %836 = vmatprep.subr.bf16.mxu0 0
        %837 = vmatpush1.bf16.xpose.msra.mxu0 %v791
        %838 = vmatprep.subr.bf16.mxu0 0
        %839 = vmatpush1.bf16.xpose.msra.mxu0 %v792
        %840 = vmatprep.subr.bf16.mxu0 0
        %841 = vmatpush1.bf16.xpose.msra.mxu0 %v793
        %842 = vmatprep.mubr.bf16.mxu0 0
        %843 = vmatmul.mubr.bf16.gmra.mrb[0].mxu0 %v457
        %v844 = vpop.f32.mrb[0].mxu0
        %v845 = vadd.f32 %v418, %v844
        %v846 = vpop.f32.mrb[0].mxu0
        %v847 = vadd.f32 %v422, %v846
        %v848 = vpop.f32.mrb[0].mxu0
        %v849 = vadd.f32 %v418, %v848
        %v850 = vpop.f32.mrb[0].mxu0
        %v851 = vadd.f32 %v422, %v850
        %852 = vmatprep.mubr.bf16.mxu0 0
        %853 = vmatmul.mubr.bf16.gmra.mrb[0].mxu0 %v458
        %v854 = vpop.f32.mrb[0].mxu0
        %v855 = vadd.f32 %v418, %v854
        %v856 = vpop.f32.mrb[0].mxu0
        %v857 = vadd.f32 %v422, %v856
        %v858 = vpop.f32.mrb[0].mxu0
        %v859 = vadd.f32 %v418, %v858
        %v860 = vpop.f32.mrb[0].mxu0
        %v861 = vadd.f32 %v422, %v860
        %862 = vmatprep.mubr.bf16.mxu0 0
        %863 = vmatmul.mubr.bf16.gmra.mrb[0].mxu0 %v459
        %v864 = vpop.f32.mrb[0].mxu0
        %v865 = vadd.f32 %v418, %v864
        %v866 = vpop.f32.mrb[0].mxu0
        %v867 = vadd.f32 %v422, %v866
        %v868 = vpop.f32.mrb[0].mxu0
        %v869 = vadd.f32 %v418, %v868
        %v870 = vpop.f32.mrb[0].mxu0
        %v871 = vadd.f32 %v422, %v870
        %872 = vmatprep.mubr.bf16.mxu0 0
        %873 = vmatmul.mubr.bf16.gmra.mrb[0].mxu0 %v460
        %v874 = vpop.f32.mrb[0].mxu0
        %v875 = vadd.f32 %v418, %v874
        %v876 = vpop.f32.mrb[0].mxu0
        %v877 = vadd.f32 %v422, %v876
        %v878 = vpop.f32.mrb[0].mxu0
        %v879 = vadd.f32 %v418, %v878
        %v880 = vpop.f32.mrb[0].mxu0
        %v881 = vadd.f32 %v422, %v880
        %882 = vmatprep.mubr.bf16.mxu0 0
        %883 = vmatmul.mubr.bf16.gmra.mrb[0].mxu0 %v461
        %v884 = vpop.f32.mrb[0].mxu0
        %v885 = vadd.f32 %v418, %v884
        %v886 = vpop.f32.mrb[0].mxu0
        %v887 = vadd.f32 %v422, %v886
        %v888 = vpop.f32.mrb[0].mxu0
        %v889 = vadd.f32 %v418, %v888
        %v890 = vpop.f32.mrb[0].mxu0
        %v891 = vadd.f32 %v422, %v890
        %892 = vmatprep.mubr.bf16.mxu0 0
        %893 = vmatmul.mubr.bf16.gmra.mrb[0].mxu0 %v462
        %v894 = vpop.f32.mrb[0].mxu0
        %v895 = vadd.f32 %v418, %v894
        %v896 = vpop.f32.mrb[0].mxu0
        %v897 = vadd.f32 %v422, %v896
        %v898 = vpop.f32.mrb[0].mxu0
        %v899 = vadd.f32 %v418, %v898
        %v900 = vpop.f32.mrb[0].mxu0
        %v901 = vadd.f32 %v422, %v900
        %902 = vmatprep.mubr.bf16.mxu0 0
        %903 = vmatmul.mubr.bf16.gmra.mrb[0].mxu0 %v463
        %v904 = vpop.f32.mrb[0].mxu0
        %v905 = vadd.f32 %v418, %v904
        %v906 = vpop.f32.mrb[0].mxu0
        %v907 = vadd.f32 %v422, %v906
        %v908 = vpop.f32.mrb[0].mxu0
        %v909 = vadd.f32 %v418, %v908
        %v910 = vpop.f32.mrb[0].mxu0
        %v911 = vadd.f32 %v422, %v910
        %912 = vmatprep.mubr.bf16.mxu0 0
        %913 = vmatmul.mubr.bf16.gmra.mrb[0].mxu0 %v464
        %v914 = vpop.f32.mrb[0].mxu0
        %v915 = vadd.f32 %v418, %v914
        %v916 = vpop.f32.mrb[0].mxu0
        %v917 = vadd.f32 %v422, %v916
        %v918 = vpop.f32.mrb[0].mxu0
        %v919 = vadd.f32 %v418, %v918
        %v920 = vpop.f32.mrb[0].mxu0
        %v921 = vadd.f32 %v422, %v920
        %922 = vdwg.mxu0
        %v923 = vld [vmem:[#allocation2] sm:$0xff]
        %v924 = vld [vmem:[#allocation2 + $0x8] sm:$0xff]
        %v925 = vld [vmem:[#allocation2 + $0x10] sm:$0xff]
        %v926 = vld [vmem:[#allocation2 + $0x18] sm:$0xff]
        %v927 = vld [vmem:[#allocation2 + $0x20] sm:$0xff]
        %v928 = vld [vmem:[#allocation2 + $0x28] sm:$0xff]
        %v929 = vld [vmem:[#allocation2 + $0x30] sm:$0xff]
        %v930 = vld [vmem:[#allocation2 + $0x38] sm:$0xff]
        %v931 = vld [vmem:[#allocation2 + $0x40] sm:$0xff]
        %v932 = vld [vmem:[#allocation2 + $0x48] sm:$0xff]
        %v933 = vld [vmem:[#allocation2 + $0x50] sm:$0xff]
        %v934 = vld [vmem:[#allocation2 + $0x58] sm:$0xff]
        %v935 = vld [vmem:[#allocation2 + $0x60] sm:$0xff]
        %v936 = vld [vmem:[#allocation2 + $0x68] sm:$0xff]
        %v937 = vld [vmem:[#allocation2 + $0x70] sm:$0xff]
        %v938 = vld [vmem:[#allocation2 + $0x78] sm:$0xff]
        %v939 = vmax.f32 %v604, %v606
        %940 = vmax.xlane.f32.xlu0 %v939
        %v941 = vpop.xlane.xlu0 %940
        %v942 = vmax.f32 %v608, %v610
        %943 = vmax.xlane.f32.xlu0 %v942
        %v944 = vpop.xlane.xlu0 %943
        %v945 = vmax.f32 %v614, %v616
        %946 = vmax.xlane.f32.xlu0 %v945
        %v947 = vpop.xlane.xlu0 %946
        %v948 = vmax.f32 %v618, %v620
        %949 = vmax.xlane.f32.xlu0 %v948
        %v950 = vpop.xlane.xlu0 %949
        %v951 = vmax.f32 %v624, %v626
        %952 = vmax.xlane.f32.xlu0 %v951
        %v953 = vpop.xlane.xlu0 %952
        %v954 = vmax.f32 %v628, %v630
        %955 = vmax.xlane.f32.xlu0 %v954
        %v956 = vpop.xlane.xlu0 %955
        %v957 = vmax.f32 %v634, %v636
        %958 = vmax.xlane.f32.xlu0 %v957
        %v959 = vpop.xlane.xlu0 %958
        %v960 = vmax.f32 %v638, %v640
        %961 = vmax.xlane.f32.xlu0 %v960
        %v962 = vpop.xlane.xlu0 %961
        %v963 = vmax.f32 %v644, %v646
        %964 = vmax.xlane.f32.xlu0 %v963
        %v965 = vpop.xlane.xlu0 %964
        %v966 = vmax.f32 %v648, %v650
        %967 = vmax.xlane.f32.xlu0 %v966
        %v968 = vpop.xlane.xlu0 %967
        %v969 = vmax.f32 %v654, %v656
        %970 = vmax.xlane.f32.xlu0 %v969
        %v971 = vpop.xlane.xlu0 %970
        %v972 = vmax.f32 %v658, %v660
        %973 = vmax.xlane.f32.xlu0 %v972
        %v974 = vpop.xlane.xlu0 %973
        %v975 = vmax.f32 %v664, %v666
        %976 = vmax.xlane.f32.xlu0 %v975
        %v977 = vpop.xlane.xlu0 %976
        %v978 = vmax.f32 %v668, %v670
        %979 = vmax.xlane.f32.xlu0 %v978
        %v980 = vpop.xlane.xlu0 %979
        %v981 = vmax.f32 %v674, %v676
        %982 = vmax.xlane.f32.xlu0 %v981
        %v983 = vpop.xlane.xlu0 %982
        %v984 = vmax.f32 %v678, %v680
        %985 = vmax.xlane.f32.xlu0 %v984
        %v986 = vpop.xlane.xlu0 %985
        %v987 = vmax.f32 %v845, %v847
        %988 = vmax.xlane.f32.xlu0 %v987
        %v989 = vpop.xlane.xlu0 %988
        %v990 = vmax.f32 %v849, %v851
        %991 = vmax.xlane.f32.xlu0 %v990
        %v992 = vpop.xlane.xlu0 %991
        %v993 = vmax.f32 %v855, %v857
        %994 = vmax.xlane.f32.xlu0 %v993
        %v995 = vpop.xlane.xlu0 %994
        %v996 = vmax.f32 %v859, %v861
        %997 = vmax.xlane.f32.xlu0 %v996
        %v998 = vpop.xlane.xlu0 %997
        %v999 = vmax.f32 %v865, %v867
        %1000 = vmax.xlane.f32.xlu0 %v999
        %v1001 = vpop.xlane.xlu0 %1000
        %v1002 = vmax.f32 %v869, %v871
        %1003 = vmax.xlane.f32.xlu0 %v1002
        %v1004 = vpop.xlane.xlu0 %1003
        %v1005 = vmax.f32 %v875, %v877
        %1006 = vmax.xlane.f32.xlu0 %v1005
        %v1007 = vpop.xlane.xlu0 %1006
        %v1008 = vmax.f32 %v879, %v881
        %1009 = vmax.xlane.f32.xlu0 %v1008
        %v1010 = vpop.xlane.xlu0 %1009
        %v1011 = vmax.f32 %v885, %v887
        %1012 = vmax.xlane.f32.xlu0 %v1011
        %v1013 = vpop.xlane.xlu0 %1012
        %v1014 = vmax.f32 %v889, %v891
        %1015 = vmax.xlane.f32.xlu0 %v1014
        %v1016 = vpop.xlane.xlu0 %1015
        %v1017 = vmax.f32 %v895, %v897
        %1018 = vmax.xlane.f32.xlu0 %v1017
        %v1019 = vpop.xlane.xlu0 %1018
        %v1020 = vmax.f32 %v899, %v901
        %1021 = vmax.xlane.f32.xlu0 %v1020
        %v1022 = vpop.xlane.xlu0 %1021
        %v1023 = vmax.f32 %v905, %v907
        %1024 = vmax.xlane.f32.xlu0 %v1023
        %v1025 = vpop.xlane.xlu0 %1024
        %v1026 = vmax.f32 %v909, %v911
        %1027 = vmax.xlane.f32.xlu0 %v1026
        %v1028 = vpop.xlane.xlu0 %1027
        %v1029 = vmax.f32 %v915, %v917
        %1030 = vmax.xlane.f32.xlu0 %v1029
        %v1031 = vpop.xlane.xlu0 %1030
        %v1032 = vmax.f32 %v919, %v921
        %1033 = vmax.xlane.f32.xlu0 %v1032
        %v1034 = vpop.xlane.xlu0 %1033
        %v1035 = vmax.f32 %v941, %v989
        %v1036 = vmax.f32 %v944, %v992
        %v1037 = vmax.f32 %v947, %v995
        %v1038 = vmax.f32 %v950, %v998
        %v1039 = vmax.f32 %v953, %v1001
        %v1040 = vmax.f32 %v956, %v1004
        %v1041 = vmax.f32 %v959, %v1007
        %v1042 = vmax.f32 %v962, %v1010
        %v1043 = vmax.f32 %v965, %v1013
        %v1044 = vmax.f32 %v968, %v1016
        %v1045 = vmax.f32 %v971, %v1019
        %v1046 = vmax.f32 %v974, %v1022
        %v1047 = vmax.f32 %v977, %v1025
        %v1048 = vmax.f32 %v980, %v1028
        %v1049 = vmax.f32 %v983, %v1031
        %v1050 = vmax.f32 %v986, %v1034
        %v1051 = vmax.f32 %v923, %v1035
        %v1052 = vmax.f32 %v924, %v1036
        %v1053 = vmax.f32 %v925, %v1037
        %v1054 = vmax.f32 %v926, %v1038
        %v1055 = vmax.f32 %v927, %v1039
        %v1056 = vmax.f32 %v928, %v1040
        %v1057 = vmax.f32 %v929, %v1041
        %v1058 = vmax.f32 %v930, %v1042
        %v1059 = vmax.f32 %v931, %v1043
        %v1060 = vmax.f32 %v932, %v1044
        %v1061 = vmax.f32 %v933, %v1045
        %v1062 = vmax.f32 %v934, %v1046
        %v1063 = vmax.f32 %v935, %v1047
        %v1064 = vmax.f32 %v936, %v1048
        %v1065 = vmax.f32 %v937, %v1049
        %v1066 = vmax.f32 %v938, %v1050
        %1068 = vset.pattern.permute.xlu0 0
        %1069 = vperm.xlu0 %1068, %v1051
        %v1070 = vpop.permute.xlu0 %1069
        %1073 = vset.pattern.permute.xlu0 0
        %1074 = vperm.xlu0 %1073, %v1052
        %v1075 = vpop.permute.xlu0 %1074
        %1078 = vset.pattern.permute.xlu0 0
        %1079 = vperm.xlu0 %1078, %v1053
        %v1080 = vpop.permute.xlu0 %1079
        %1083 = vset.pattern.permute.xlu0 0
        %1084 = vperm.xlu0 %1083, %v1054
        %v1085 = vpop.permute.xlu0 %1084
        %1088 = vset.pattern.permute.xlu0 0
        %1089 = vperm.xlu0 %1088, %v1055
        %v1090 = vpop.permute.xlu0 %1089
        %1093 = vset.pattern.permute.xlu0 0
        %1094 = vperm.xlu0 %1093, %v1056
        %v1095 = vpop.permute.xlu0 %1094
        %1098 = vset.pattern.permute.xlu0 0
        %1099 = vperm.xlu0 %1098, %v1057
        %v1100 = vpop.permute.xlu0 %1099
        %1103 = vset.pattern.permute.xlu0 0
        %1104 = vperm.xlu0 %1103, %v1058
        %v1105 = vpop.permute.xlu0 %1104
        %1108 = vset.pattern.permute.xlu0 0
        %1109 = vperm.xlu0 %1108, %v1059
        %v1110 = vpop.permute.xlu0 %1109
        %1113 = vset.pattern.permute.xlu0 0
        %1114 = vperm.xlu0 %1113, %v1060
        %v1115 = vpop.permute.xlu0 %1114
        %1118 = vset.pattern.permute.xlu0 0
        %1119 = vperm.xlu0 %1118, %v1061
        %v1120 = vpop.permute.xlu0 %1119
        %1123 = vset.pattern.permute.xlu0 0
        %1124 = vperm.xlu0 %1123, %v1062
        %v1125 = vpop.permute.xlu0 %1124
        %1128 = vset.pattern.permute.xlu0 0
        %1129 = vperm.xlu0 %1128, %v1063
        %v1130 = vpop.permute.xlu0 %1129
        %1133 = vset.pattern.permute.xlu0 0
        %1134 = vperm.xlu0 %1133, %v1064
        %v1135 = vpop.permute.xlu0 %1134
        %1138 = vset.pattern.permute.xlu0 0
        %1139 = vperm.xlu0 %1138, %v1065
        %v1140 = vpop.permute.xlu0 %1139
        %1143 = vset.pattern.permute.xlu0 0
        %1144 = vperm.xlu0 %1143, %v1066
        %v1145 = vpop.permute.xlu0 %1144
        %v1147 = vsub.f32 %v604, %v1070
        %v1148 = vsub.f32 %v606, %v1070
        %v1149 = vsub.f32 %v608, %v1075
        %v1150 = vsub.f32 %v610, %v1075
        %v1151 = vsub.f32 %v614, %v1080
        %v1152 = vsub.f32 %v616, %v1080
        %v1153 = vsub.f32 %v618, %v1085
        %v1154 = vsub.f32 %v620, %v1085
        %v1155 = vsub.f32 %v624, %v1090
        %v1156 = vsub.f32 %v626, %v1090
        %v1157 = vsub.f32 %v628, %v1095
        %v1158 = vsub.f32 %v630, %v1095
        %v1159 = vsub.f32 %v634, %v1100
        %v1160 = vsub.f32 %v636, %v1100
        %v1161 = vsub.f32 %v638, %v1105
        %v1162 = vsub.f32 %v640, %v1105
        %v1163 = vsub.f32 %v644, %v1110
        %v1164 = vsub.f32 %v646, %v1110
        %v1165 = vsub.f32 %v648, %v1115
        %v1166 = vsub.f32 %v650, %v1115
        %v1167 = vsub.f32 %v654, %v1120
        %v1168 = vsub.f32 %v656, %v1120
        %v1169 = vsub.f32 %v658, %v1125
        %v1170 = vsub.f32 %v660, %v1125
        %v1171 = vsub.f32 %v664, %v1130
        %v1172 = vsub.f32 %v666, %v1130
        %v1173 = vsub.f32 %v668, %v1135
        %v1174 = vsub.f32 %v670, %v1135
        %v1175 = vsub.f32 %v674, %v1140
        %v1176 = vsub.f32 %v676, %v1140
        %v1177 = vsub.f32 %v678, %v1145
        %v1178 = vsub.f32 %v680, %v1145
        %v1179 = vmul.f32 %v1147, 1.442695
        %v1180 = vpow.pop %v1179
        %v1181 = vmul.f32 %v1148, 1.442695
        %v1182 = vpow.pop %v1181
        %v1183 = vmul.f32 %v1149, 1.442695
        %v1184 = vpow.pop %v1183
        %v1185 = vmul.f32 %v1150, 1.442695
        %v1186 = vpow.pop %v1185
        %v1187 = vmul.f32 %v1151, 1.442695
        %v1188 = vpow.pop %v1187
        %v1189 = vmul.f32 %v1152, 1.442695
        %v1190 = vpow.pop %v1189
        %v1191 = vmul.f32 %v1153, 1.442695
        %v1192 = vpow.pop %v1191
        %v1193 = vmul.f32 %v1154, 1.442695
        %v1194 = vpow.pop %v1193
        %v1195 = vmul.f32 %v1155, 1.442695
        %v1196 = vpow.pop %v1195
        %v1197 = vmul.f32 %v1156, 1.442695
        %v1198 = vpow.pop %v1197
        %v1199 = vmul.f32 %v1157, 1.442695
        %v1200 = vpow.pop %v1199
        %v1201 = vmul.f32 %v1158, 1.442695
        %v1202 = vpow.pop %v1201
        %v1203 = vmul.f32 %v1159, 1.442695
        %v1204 = vpow.pop %v1203
        %v1205 = vmul.f32 %v1160, 1.442695
        %v1206 = vpow.pop %v1205
        %v1207 = vmul.f32 %v1161, 1.442695
        %v1208 = vpow.pop %v1207
        %v1209 = vmul.f32 %v1162, 1.442695
        %v1210 = vpow.pop %v1209
        %v1211 = vmul.f32 %v1163, 1.442695
        %v1212 = vpow.pop %v1211
        %v1213 = vmul.f32 %v1164, 1.442695
        %v1214 = vpow.pop %v1213
        %v1215 = vmul.f32 %v1165, 1.442695
        %v1216 = vpow.pop %v1215
        %v1217 = vmul.f32 %v1166, 1.442695
        %v1218 = vpow.pop %v1217
        %v1219 = vmul.f32 %v1167, 1.442695
        %v1220 = vpow.pop %v1219
        %v1221 = vmul.f32 %v1168, 1.442695
        %v1222 = vpow.pop %v1221
        %v1223 = vmul.f32 %v1169, 1.442695
        %v1224 = vpow.pop %v1223
        %v1225 = vmul.f32 %v1170, 1.442695
        %v1226 = vpow.pop %v1225
        %v1227 = vmul.f32 %v1171, 1.442695
        %v1228 = vpow.pop %v1227
        %v1229 = vmul.f32 %v1172, 1.442695
        %v1230 = vpow.pop %v1229
        %v1231 = vmul.f32 %v1173, 1.442695
        %v1232 = vpow.pop %v1231
        %v1233 = vmul.f32 %v1174, 1.442695
        %v1234 = vpow.pop %v1233
        %v1235 = vmul.f32 %v1175, 1.442695
        %v1236 = vpow.pop %v1235
        %v1237 = vmul.f32 %v1176, 1.442695
        %v1238 = vpow.pop %v1237
        %v1239 = vmul.f32 %v1177, 1.442695
        %v1240 = vpow.pop %v1239
        %v1241 = vmul.f32 %v1178, 1.442695
        %v1242 = vpow.pop %v1241
        %v1243 = vadd.f32 %v1180, %v1182
        %1244 = vadd.xlane.f32.xlu0 %v1243
        %v1245 = vpop.xlane.xlu0 %1244
        %v1246 = vadd.f32 %v1184, %v1186
        %1247 = vadd.xlane.f32.xlu0 %v1246
        %v1248 = vpop.xlane.xlu0 %1247
        %v1249 = vadd.f32 %v1188, %v1190
        %1250 = vadd.xlane.f32.xlu0 %v1249
        %v1251 = vpop.xlane.xlu0 %1250
        %v1252 = vadd.f32 %v1192, %v1194
        %1253 = vadd.xlane.f32.xlu0 %v1252
        %v1254 = vpop.xlane.xlu0 %1253
        %v1255 = vadd.f32 %v1196, %v1198
        %1256 = vadd.xlane.f32.xlu0 %v1255
        %v1257 = vpop.xlane.xlu0 %1256
        %v1258 = vadd.f32 %v1200, %v1202
        %1259 = vadd.xlane.f32.xlu0 %v1258
        %v1260 = vpop.xlane.xlu0 %1259
        %v1261 = vadd.f32 %v1204, %v1206
        %1262 = vadd.xlane.f32.xlu0 %v1261
        %v1263 = vpop.xlane.xlu0 %1262
        %v1264 = vadd.f32 %v1208, %v1210
        %1265 = vadd.xlane.f32.xlu0 %v1264
        %v1266 = vpop.xlane.xlu0 %1265
        %v1267 = vadd.f32 %v1212, %v1214
        %1268 = vadd.xlane.f32.xlu0 %v1267
        %v1269 = vpop.xlane.xlu0 %1268
        %v1270 = vadd.f32 %v1216, %v1218
        %1271 = vadd.xlane.f32.xlu0 %v1270
        %v1272 = vpop.xlane.xlu0 %1271
        %v1273 = vadd.f32 %v1220, %v1222
        %1274 = vadd.xlane.f32.xlu0 %v1273
        %v1275 = vpop.xlane.xlu0 %1274
        %v1276 = vadd.f32 %v1224, %v1226
        %1277 = vadd.xlane.f32.xlu0 %v1276
        %v1278 = vpop.xlane.xlu0 %1277
        %v1279 = vadd.f32 %v1228, %v1230
        %1280 = vadd.xlane.f32.xlu0 %v1279
        %v1281 = vpop.xlane.xlu0 %1280
        %v1282 = vadd.f32 %v1232, %v1234
        %1283 = vadd.xlane.f32.xlu0 %v1282
        %v1284 = vpop.xlane.xlu0 %1283
        %v1285 = vadd.f32 %v1236, %v1238
        %1286 = vadd.xlane.f32.xlu0 %v1285
        %v1287 = vpop.xlane.xlu0 %1286
        %v1288 = vadd.f32 %v1240, %v1242
        %1289 = vadd.xlane.f32.xlu0 %v1288
        %v1290 = vpop.xlane.xlu0 %1289
        %v1291 = vsub.f32 %v845, %v1070
        %v1292 = vsub.f32 %v847, %v1070
        %v1293 = vsub.f32 %v849, %v1075
        %v1294 = vsub.f32 %v851, %v1075
        %v1295 = vsub.f32 %v855, %v1080
        %v1296 = vsub.f32 %v857, %v1080
        %v1297 = vsub.f32 %v859, %v1085
        %v1298 = vsub.f32 %v861, %v1085
        %v1299 = vsub.f32 %v865, %v1090
        %v1300 = vsub.f32 %v867, %v1090
        %v1301 = vsub.f32 %v869, %v1095
        %v1302 = vsub.f32 %v871, %v1095
        %v1303 = vsub.f32 %v875, %v1100
        %v1304 = vsub.f32 %v877, %v1100
        %v1305 = vsub.f32 %v879, %v1105
        %v1306 = vsub.f32 %v881, %v1105
        %v1307 = vsub.f32 %v885, %v1110
        %v1308 = vsub.f32 %v887, %v1110
        %v1309 = vsub.f32 %v889, %v1115
        %v1310 = vsub.f32 %v891, %v1115
        %v1311 = vsub.f32 %v895, %v1120
        %v1312 = vsub.f32 %v897, %v1120
        %v1313 = vsub.f32 %v899, %v1125
        %v1314 = vsub.f32 %v901, %v1125
        %v1315 = vsub.f32 %v905, %v1130
        %v1316 = vsub.f32 %v907, %v1130
        %v1317 = vsub.f32 %v909, %v1135
        %v1318 = vsub.f32 %v911, %v1135
        %v1319 = vsub.f32 %v915, %v1140
        %v1320 = vsub.f32 %v917, %v1140
        %v1321 = vsub.f32 %v919, %v1145
        %v1322 = vsub.f32 %v921, %v1145
        %v1323 = vmul.f32 %v1291, 1.442695
        %v1324 = vpow.pop %v1323
        %v1325 = vmul.f32 %v1292, 1.442695
        %v1326 = vpow.pop %v1325
        %v1327 = vmul.f32 %v1293, 1.442695
        %v1328 = vpow.pop %v1327
        %v1329 = vmul.f32 %v1294, 1.442695
        %v1330 = vpow.pop %v1329
        %v1331 = vmul.f32 %v1295, 1.442695
        %v1332 = vpow.pop %v1331
        %v1333 = vmul.f32 %v1296, 1.442695
        %v1334 = vpow.pop %v1333
        %v1335 = vmul.f32 %v1297, 1.442695
        %v1336 = vpow.pop %v1335
        %v1337 = vmul.f32 %v1298, 1.442695
        %v1338 = vpow.pop %v1337
        %v1339 = vmul.f32 %v1299, 1.442695
        %v1340 = vpow.pop %v1339
        %v1341 = vmul.f32 %v1300, 1.442695
        %v1342 = vpow.pop %v1341
        %v1343 = vmul.f32 %v1301, 1.442695
        %v1344 = vpow.pop %v1343
        %v1345 = vmul.f32 %v1302, 1.442695
        %v1346 = vpow.pop %v1345
        %v1347 = vmul.f32 %v1303, 1.442695
        %v1348 = vpow.pop %v1347
        %v1349 = vmul.f32 %v1304, 1.442695
        %v1350 = vpow.pop %v1349
        %v1351 = vmul.f32 %v1305, 1.442695
        %v1352 = vpow.pop %v1351
        %v1353 = vmul.f32 %v1306, 1.442695
        %v1354 = vpow.pop %v1353
        %v1355 = vmul.f32 %v1307, 1.442695
        %v1356 = vpow.pop %v1355
        %v1357 = vmul.f32 %v1308, 1.442695
        %v1358 = vpow.pop %v1357
        %v1359 = vmul.f32 %v1309, 1.442695
        %v1360 = vpow.pop %v1359
        %v1361 = vmul.f32 %v1310, 1.442695
        %v1362 = vpow.pop %v1361
        %v1363 = vmul.f32 %v1311, 1.442695
        %v1364 = vpow.pop %v1363
        %v1365 = vmul.f32 %v1312, 1.442695
        %v1366 = vpow.pop %v1365
        %v1367 = vmul.f32 %v1313, 1.442695
        %v1368 = vpow.pop %v1367
        %v1369 = vmul.f32 %v1314, 1.442695
        %v1370 = vpow.pop %v1369
        %v1371 = vmul.f32 %v1315, 1.442695
        %v1372 = vpow.pop %v1371
        %v1373 = vmul.f32 %v1316, 1.442695
        %v1374 = vpow.pop %v1373
        %v1375 = vmul.f32 %v1317, 1.442695
        %v1376 = vpow.pop %v1375
        %v1377 = vmul.f32 %v1318, 1.442695
        %v1378 = vpow.pop %v1377
        %v1379 = vmul.f32 %v1319, 1.442695
        %v1380 = vpow.pop %v1379
        %v1381 = vmul.f32 %v1320, 1.442695
        %v1382 = vpow.pop %v1381
        %v1383 = vmul.f32 %v1321, 1.442695
        %v1384 = vpow.pop %v1383
        %v1385 = vmul.f32 %v1322, 1.442695
        %v1386 = vpow.pop %v1385
        %v1387 = vadd.f32 %v1324, %v1326
        %1388 = vadd.xlane.f32.xlu0 %v1387
        %v1389 = vpop.xlane.xlu0 %1388
        %v1390 = vadd.f32 %v1328, %v1330
        %1391 = vadd.xlane.f32.xlu0 %v1390
        %v1392 = vpop.xlane.xlu0 %1391
        %v1393 = vadd.f32 %v1332, %v1334
        %1394 = vadd.xlane.f32.xlu0 %v1393
        %v1395 = vpop.xlane.xlu0 %1394
        %v1396 = vadd.f32 %v1336, %v1338
        %1397 = vadd.xlane.f32.xlu0 %v1396
        %v1398 = vpop.xlane.xlu0 %1397
        %v1399 = vadd.f32 %v1340, %v1342
        %1400 = vadd.xlane.f32.xlu0 %v1399
        %v1401 = vpop.xlane.xlu0 %1400
        %v1402 = vadd.f32 %v1344, %v1346
        %1403 = vadd.xlane.f32.xlu0 %v1402
        %v1404 = vpop.xlane.xlu0 %1403
        %v1405 = vadd.f32 %v1348, %v1350
        %1406 = vadd.xlane.f32.xlu0 %v1405
        %v1407 = vpop.xlane.xlu0 %1406
        %v1408 = vadd.f32 %v1352, %v1354
        %1409 = vadd.xlane.f32.xlu0 %v1408
        %v1410 = vpop.xlane.xlu0 %1409
        %v1411 = vadd.f32 %v1356, %v1358
        %1412 = vadd.xlane.f32.xlu0 %v1411
        %v1413 = vpop.xlane.xlu0 %1412
        %v1414 = vadd.f32 %v1360, %v1362
        %1415 = vadd.xlane.f32.xlu0 %v1414
        %v1416 = vpop.xlane.xlu0 %1415
        %v1417 = vadd.f32 %v1364, %v1366
        %1418 = vadd.xlane.f32.xlu0 %v1417
        %v1419 = vpop.xlane.xlu0 %1418
        %v1420 = vadd.f32 %v1368, %v1370
        %1421 = vadd.xlane.f32.xlu0 %v1420
        %v1422 = vpop.xlane.xlu0 %1421
        %v1423 = vadd.f32 %v1372, %v1374
        %1424 = vadd.xlane.f32.xlu0 %v1423
        %v1425 = vpop.xlane.xlu0 %1424
        %v1426 = vadd.f32 %v1376, %v1378
        %1427 = vadd.xlane.f32.xlu0 %v1426
        %v1428 = vpop.xlane.xlu0 %1427
        %v1429 = vadd.f32 %v1380, %v1382
        %1430 = vadd.xlane.f32.xlu0 %v1429
        %v1431 = vpop.xlane.xlu0 %1430
        %v1432 = vadd.f32 %v1384, %v1386
        %1433 = vadd.xlane.f32.xlu0 %v1432
        %v1434 = vpop.xlane.xlu0 %1433
        %v1435 = vadd.f32 %v1245, %v1389
        %v1436 = vadd.f32 %v1248, %v1392
        %v1437 = vadd.f32 %v1251, %v1395
        %v1438 = vadd.f32 %v1254, %v1398
        %v1439 = vadd.f32 %v1257, %v1401
        %v1440 = vadd.f32 %v1260, %v1404
        %v1441 = vadd.f32 %v1263, %v1407
        %v1442 = vadd.f32 %v1266, %v1410
        %v1443 = vadd.f32 %v1269, %v1413
        %v1444 = vadd.f32 %v1272, %v1416
        %v1445 = vadd.f32 %v1275, %v1419
        %v1446 = vadd.f32 %v1278, %v1422
        %v1447 = vadd.f32 %v1281, %v1425
        %v1448 = vadd.f32 %v1284, %v1428
        %v1449 = vadd.f32 %v1287, %v1431
        %v1450 = vadd.f32 %v1290, %v1434
        %v1451 = vsub.f32 %v923, %v1051
        %v1452 = vsub.f32 %v924, %v1052
        %v1453 = vsub.f32 %v925, %v1053
        %v1454 = vsub.f32 %v926, %v1054
        %v1455 = vsub.f32 %v927, %v1055
        %v1456 = vsub.f32 %v928, %v1056
        %v1457 = vsub.f32 %v929, %v1057
        %v1458 = vsub.f32 %v930, %v1058
        %v1459 = vsub.f32 %v931, %v1059
        %v1460 = vsub.f32 %v932, %v1060
        %v1461 = vsub.f32 %v933, %v1061
        %v1462 = vsub.f32 %v934, %v1062
        %v1463 = vsub.f32 %v935, %v1063
        %v1464 = vsub.f32 %v936, %v1064
        %v1465 = vsub.f32 %v937, %v1065
        %v1466 = vsub.f32 %v938, %v1066
        %v1467 = vmul.f32 %v1451, 1.442695
        %v1468 = vpow.pop %v1467
        %v1469 = vmul.f32 %v1452, 1.442695
        %v1470 = vpow.pop %v1469
        %v1471 = vmul.f32 %v1453, 1.442695
        %v1472 = vpow.pop %v1471
        %v1473 = vmul.f32 %v1454, 1.442695
        %v1474 = vpow.pop %v1473
        %v1475 = vmul.f32 %v1455, 1.442695
        %v1476 = vpow.pop %v1475
        %v1477 = vmul.f32 %v1456, 1.442695
        %v1478 = vpow.pop %v1477
        %v1479 = vmul.f32 %v1457, 1.442695
        %v1480 = vpow.pop %v1479
        %v1481 = vmul.f32 %v1458, 1.442695
        %v1482 = vpow.pop %v1481
        %v1483 = vmul.f32 %v1459, 1.442695
        %v1484 = vpow.pop %v1483
        %v1485 = vmul.f32 %v1460, 1.442695
        %v1486 = vpow.pop %v1485
        %v1487 = vmul.f32 %v1461, 1.442695
        %v1488 = vpow.pop %v1487
        %v1489 = vmul.f32 %v1462, 1.442695
        %v1490 = vpow.pop %v1489
        %v1491 = vmul.f32 %v1463, 1.442695
        %v1492 = vpow.pop %v1491
        %v1493 = vmul.f32 %v1464, 1.442695
        %v1494 = vpow.pop %v1493
        %v1495 = vmul.f32 %v1465, 1.442695
        %v1496 = vpow.pop %v1495
        %v1497 = vmul.f32 %v1466, 1.442695
        %v1498 = vpow.pop %v1497
        %v1499 = vld [vmem:[#allocation3] sm:$0xff]
        %v1500 = vld [vmem:[#allocation3 + $0x8] sm:$0xff]
        %v1501 = vld [vmem:[#allocation3 + $0x10] sm:$0xff]
        %v1502 = vld [vmem:[#allocation3 + $0x18] sm:$0xff]
        %v1503 = vld [vmem:[#allocation3 + $0x20] sm:$0xff]
        %v1504 = vld [vmem:[#allocation3 + $0x28] sm:$0xff]
        %v1505 = vld [vmem:[#allocation3 + $0x30] sm:$0xff]
        %v1506 = vld [vmem:[#allocation3 + $0x38] sm:$0xff]
        %v1507 = vld [vmem:[#allocation3 + $0x40] sm:$0xff]
        %v1508 = vld [vmem:[#allocation3 + $0x48] sm:$0xff]
        %v1509 = vld [vmem:[#allocation3 + $0x50] sm:$0xff]
        %v1510 = vld [vmem:[#allocation3 + $0x58] sm:$0xff]
        %v1511 = vld [vmem:[#allocation3 + $0x60] sm:$0xff]
        %v1512 = vld [vmem:[#allocation3 + $0x68] sm:$0xff]
        %v1513 = vld [vmem:[#allocation3 + $0x70] sm:$0xff]
        %v1514 = vld [vmem:[#allocation3 + $0x78] sm:$0xff]
        %v1515 = vmul.f32 %v1468, %v1499
        %v1516 = vmul.f32 %v1470, %v1500
        %v1517 = vmul.f32 %v1472, %v1501
        %v1518 = vmul.f32 %v1474, %v1502
        %v1519 = vmul.f32 %v1476, %v1503
        %v1520 = vmul.f32 %v1478, %v1504
        %v1521 = vmul.f32 %v1480, %v1505
        %v1522 = vmul.f32 %v1482, %v1506
        %v1523 = vmul.f32 %v1484, %v1507
        %v1524 = vmul.f32 %v1486, %v1508
        %v1525 = vmul.f32 %v1488, %v1509
        %v1526 = vmul.f32 %v1490, %v1510
        %v1527 = vmul.f32 %v1492, %v1511
        %v1528 = vmul.f32 %v1494, %v1512
        %v1529 = vmul.f32 %v1496, %v1513
        %v1530 = vmul.f32 %v1498, %v1514
        %v1531 = vadd.f32 %v1515, %v1435
        %v1532 = vadd.f32 %v1516, %v1436
        %v1533 = vadd.f32 %v1517, %v1437
        %v1534 = vadd.f32 %v1518, %v1438
        %v1535 = vadd.f32 %v1519, %v1439
        %v1536 = vadd.f32 %v1520, %v1440
        %v1537 = vadd.f32 %v1521, %v1441
        %v1538 = vadd.f32 %v1522, %v1442
        %v1539 = vadd.f32 %v1523, %v1443
        %v1540 = vadd.f32 %v1524, %v1444
        %v1541 = vadd.f32 %v1525, %v1445
        %v1542 = vadd.f32 %v1526, %v1446
        %v1543 = vadd.f32 %v1527, %v1447
        %v1544 = vadd.f32 %v1528, %v1448
        %v1545 = vadd.f32 %v1529, %v1449
        %v1546 = vadd.f32 %v1530, %v1450
        %vm1547 = vcmask 7168
        %1548 = vst.msk [vmem:[#allocation3] sm:$0xff] %vm1547, %v1531
        %1549 = vst.msk [vmem:[#allocation3 + $0x8] sm:$0xff] %vm1547, %v1532
        %1550 = vst.msk [vmem:[#allocation3 + $0x10] sm:$0xff] %vm1547, %v1533
        %1551 = vst.msk [vmem:[#allocation3 + $0x18] sm:$0xff] %vm1547, %v1534
        %1552 = vst.msk [vmem:[#allocation3 + $0x20] sm:$0xff] %vm1547, %v1535
        %1553 = vst.msk [vmem:[#allocation3 + $0x28] sm:$0xff] %vm1547, %v1536
        %1554 = vst.msk [vmem:[#allocation3 + $0x30] sm:$0xff] %vm1547, %v1537
        %1555 = vst.msk [vmem:[#allocation3 + $0x38] sm:$0xff] %vm1547, %v1538
        %1556 = vst.msk [vmem:[#allocation3 + $0x40] sm:$0xff] %vm1547, %v1539
        %1557 = vst.msk [vmem:[#allocation3 + $0x48] sm:$0xff] %vm1547, %v1540
        %1558 = vst.msk [vmem:[#allocation3 + $0x50] sm:$0xff] %vm1547, %v1541
        %1559 = vst.msk [vmem:[#allocation3 + $0x58] sm:$0xff] %vm1547, %v1542
        %1560 = vst.msk [vmem:[#allocation3 + $0x60] sm:$0xff] %vm1547, %v1543
        %1561 = vst.msk [vmem:[#allocation3 + $0x68] sm:$0xff] %vm1547, %v1544
        %1562 = vst.msk [vmem:[#allocation3 + $0x70] sm:$0xff] %vm1547, %v1545
        %1563 = vst.msk [vmem:[#allocation3 + $0x78] sm:$0xff] %vm1547, %v1546
        %1564 = vst.msk [vmem:[#allocation2] sm:$0xff] %vm1547, %v1051
        %1565 = vst.msk [vmem:[#allocation2 + $0x8] sm:$0xff] %vm1547, %v1052
        %1566 = vst.msk [vmem:[#allocation2 + $0x10] sm:$0xff] %vm1547, %v1053
        %1567 = vst.msk [vmem:[#allocation2 + $0x18] sm:$0xff] %vm1547, %v1054
        %1568 = vst.msk [vmem:[#allocation2 + $0x20] sm:$0xff] %vm1547, %v1055
        %1569 = vst.msk [vmem:[#allocation2 + $0x28] sm:$0xff] %vm1547, %v1056
        %1570 = vst.msk [vmem:[#allocation2 + $0x30] sm:$0xff] %vm1547, %v1057
        %1571 = vst.msk [vmem:[#allocation2 + $0x38] sm:$0xff] %vm1547, %v1058
        %1572 = vst.msk [vmem:[#allocation2 + $0x40] sm:$0xff] %vm1547, %v1059
        %1573 = vst.msk [vmem:[#allocation2 + $0x48] sm:$0xff] %vm1547, %v1060
        %1574 = vst.msk [vmem:[#allocation2 + $0x50] sm:$0xff] %vm1547, %v1061
        %1575 = vst.msk [vmem:[#allocation2 + $0x58] sm:$0xff] %vm1547, %v1062
        %1576 = vst.msk [vmem:[#allocation2 + $0x60] sm:$0xff] %vm1547, %v1063
        %1577 = vst.msk [vmem:[#allocation2 + $0x68] sm:$0xff] %vm1547, %v1064
        %1578 = vst.msk [vmem:[#allocation2 + $0x70] sm:$0xff] %vm1547, %v1065
        %1579 = vst.msk [vmem:[#allocation2 + $0x78] sm:$0xff] %vm1547, %v1066
        // Predicated region
        $region49: #{tpu_custom_call.1} parent=39 // pred_check
          %p1580 = pneg %p328
        $region50: #{tpu_custom_call.1} parent=39 // pred_check_branch
          %1582 = sbr.rel (%p1580) target = $region52
        $region51: #{tpu_custom_call.1} parent=39 // pred_region
          %v1583 = vld [vmem:[%s314] sm:$0xff]
          %v1584 = vld [vmem:[%s314 + $0x8] sm:$0xff]
          %v1585 = vld [vmem:[%s314 + $0x10] sm:$0xff]
          %v1586 = vld [vmem:[%s314 + $0x18] sm:$0xff]
          %v1587 = vld [vmem:[%s314 + $0x20] sm:$0xff]
          %v1588 = vld [vmem:[%s314 + $0x28] sm:$0xff]
          %v1589 = vld [vmem:[%s314 + $0x30] sm:$0xff]
          %v1590 = vld [vmem:[%s314 + $0x38] sm:$0xff]
          %v1591 = vld [vmem:[%s314 + $0x40] sm:$0xff]
          %v1592 = vld [vmem:[%s314 + $0x48] sm:$0xff]
          %v1593 = vld [vmem:[%s314 + $0x50] sm:$0xff]
          %v1594 = vld [vmem:[%s314 + $0x58] sm:$0xff]
          %v1595 = vld [vmem:[%s314 + $0x60] sm:$0xff]
          %v1596 = vld [vmem:[%s314 + $0x68] sm:$0xff]
          %v1597 = vld [vmem:[%s314 + $0x70] sm:$0xff]
          %v1598 = vld [vmem:[%s314 + $0x78] sm:$0xff]
          %v1599 = vld [vmem:[#allocation2] sm:$0xff]
          %v1600 = vld [vmem:[#allocation2 + $0x8] sm:$0xff]
          %v1601 = vld [vmem:[#allocation2 + $0x10] sm:$0xff]
          %v1602 = vld [vmem:[#allocation2 + $0x18] sm:$0xff]
          %v1603 = vld [vmem:[#allocation2 + $0x20] sm:$0xff]
          %v1604 = vld [vmem:[#allocation2 + $0x28] sm:$0xff]
          %v1605 = vld [vmem:[#allocation2 + $0x30] sm:$0xff]
          %v1606 = vld [vmem:[#allocation2 + $0x38] sm:$0xff]
          %v1607 = vld [vmem:[#allocation2 + $0x40] sm:$0xff]
          %v1608 = vld [vmem:[#allocation2 + $0x48] sm:$0xff]
          %v1609 = vld [vmem:[#allocation2 + $0x50] sm:$0xff]
          %v1610 = vld [vmem:[#allocation2 + $0x58] sm:$0xff]
          %v1611 = vld [vmem:[#allocation2 + $0x60] sm:$0xff]
          %v1612 = vld [vmem:[#allocation2 + $0x68] sm:$0xff]
          %v1613 = vld [vmem:[#allocation2 + $0x70] sm:$0xff]
          %v1614 = vld [vmem:[#allocation2 + $0x78] sm:$0xff]
          %v1615 = vadd.f32 %v1583, %v1599
          %v1616 = vadd.f32 %v1584, %v1600
          %v1617 = vadd.f32 %v1585, %v1601
          %v1618 = vadd.f32 %v1586, %v1602
          %v1619 = vadd.f32 %v1587, %v1603
          %v1620 = vadd.f32 %v1588, %v1604
          %v1621 = vadd.f32 %v1589, %v1605
          %v1622 = vadd.f32 %v1590, %v1606
          %v1623 = vadd.f32 %v1591, %v1607
          %v1624 = vadd.f32 %v1592, %v1608
          %v1625 = vadd.f32 %v1593, %v1609
          %v1626 = vadd.f32 %v1594, %v1610
          %v1627 = vadd.f32 %v1595, %v1611
          %v1628 = vadd.f32 %v1596, %v1612
          %v1629 = vadd.f32 %v1597, %v1613
          %v1630 = vadd.f32 %v1598, %v1614
          %v1631 = vld [vmem:[#allocation3] sm:$0xff]
          %v1632 = vld [vmem:[#allocation3 + $0x8] sm:$0xff]
          %v1633 = vld [vmem:[#allocation3 + $0x10] sm:$0xff]
          %v1634 = vld [vmem:[#allocation3 + $0x18] sm:$0xff]
          %v1635 = vld [vmem:[#allocation3 + $0x20] sm:$0xff]
          %v1636 = vld [vmem:[#allocation3 + $0x28] sm:$0xff]
          %v1637 = vld [vmem:[#allocation3 + $0x30] sm:$0xff]
          %v1638 = vld [vmem:[#allocation3 + $0x38] sm:$0xff]
          %v1639 = vld [vmem:[#allocation3 + $0x40] sm:$0xff]
          %v1640 = vld [vmem:[#allocation3 + $0x48] sm:$0xff]
          %v1641 = vld [vmem:[#allocation3 + $0x50] sm:$0xff]
          %v1642 = vld [vmem:[#allocation3 + $0x58] sm:$0xff]
          %v1643 = vld [vmem:[#allocation3 + $0x60] sm:$0xff]
          %v1644 = vld [vmem:[#allocation3 + $0x68] sm:$0xff]
          %v1645 = vld [vmem:[#allocation3 + $0x70] sm:$0xff]
          %v1646 = vld [vmem:[#allocation3 + $0x78] sm:$0xff]
          %v1647 = vlog2.pop %v1631
          %v1648 = vmul.f32 %v1647, 0.6931472
          %v1649 = vlog2.pop %v1632
          %v1650 = vmul.f32 %v1649, 0.6931472
          %v1651 = vlog2.pop %v1633
          %v1652 = vmul.f32 %v1651, 0.6931472
          %v1653 = vlog2.pop %v1634
          %v1654 = vmul.f32 %v1653, 0.6931472
          %v1655 = vlog2.pop %v1635
          %v1656 = vmul.f32 %v1655, 0.6931472
          %v1657 = vlog2.pop %v1636
          %v1658 = vmul.f32 %v1657, 0.6931472
          %v1659 = vlog2.pop %v1637
          %v1660 = vmul.f32 %v1659, 0.6931472
          %v1661 = vlog2.pop %v1638
          %v1662 = vmul.f32 %v1661, 0.6931472
          %v1663 = vlog2.pop %v1639
          %v1664 = vmul.f32 %v1663, 0.6931472
          %v1665 = vlog2.pop %v1640
          %v1666 = vmul.f32 %v1665, 0.6931472
          %v1667 = vlog2.pop %v1641
          %v1668 = vmul.f32 %v1667, 0.6931472
          %v1669 = vlog2.pop %v1642
          %v1670 = vmul.f32 %v1669, 0.6931472
          %v1671 = vlog2.pop %v1643
          %v1672 = vmul.f32 %v1671, 0.6931472
          %v1673 = vlog2.pop %v1644
          %v1674 = vmul.f32 %v1673, 0.6931472
          %v1675 = vlog2.pop %v1645
          %v1676 = vmul.f32 %v1675, 0.6931472
          %v1677 = vlog2.pop %v1646
          %v1678 = vmul.f32 %v1677, 0.6931472
          %v1679 = vadd.f32 %v1615, %v1648
          %v1680 = vadd.f32 %v1616, %v1650
          %v1681 = vadd.f32 %v1617, %v1652
          %v1682 = vadd.f32 %v1618, %v1654
          %v1683 = vadd.f32 %v1619, %v1656
          %v1684 = vadd.f32 %v1620, %v1658
          %v1685 = vadd.f32 %v1621, %v1660
          %v1686 = vadd.f32 %v1622, %v1662
          %v1687 = vadd.f32 %v1623, %v1664
          %v1688 = vadd.f32 %v1624, %v1666
          %v1689 = vadd.f32 %v1625, %v1668
          %v1690 = vadd.f32 %v1626, %v1670
          %v1691 = vadd.f32 %v1627, %v1672
          %v1692 = vadd.f32 %v1628, %v1674
          %v1693 = vadd.f32 %v1629, %v1676
          %v1694 = vadd.f32 %v1630, %v1678
          %1695 = vst.msk [vmem:[%s325] sm:$0xff] %vm1547, %v1679
          %1696 = vst.msk [vmem:[%s325 + $0x8] sm:$0xff] %vm1547, %v1680
          %1697 = vst.msk [vmem:[%s325 + $0x10] sm:$0xff] %vm1547, %v1681
          %1698 = vst.msk [vmem:[%s325 + $0x18] sm:$0xff] %vm1547, %v1682
          %1699 = vst.msk [vmem:[%s325 + $0x20] sm:$0xff] %vm1547, %v1683
          %1700 = vst.msk [vmem:[%s325 + $0x28] sm:$0xff] %vm1547, %v1684
          %1701 = vst.msk [vmem:[%s325 + $0x30] sm:$0xff] %vm1547, %v1685
          %1702 = vst.msk [vmem:[%s325 + $0x38] sm:$0xff] %vm1547, %v1686
          %1703 = vst.msk [vmem:[%s325 + $0x40] sm:$0xff] %vm1547, %v1687
          %1704 = vst.msk [vmem:[%s325 + $0x48] sm:$0xff] %vm1547, %v1688
          %1705 = vst.msk [vmem:[%s325 + $0x50] sm:$0xff] %vm1547, %v1689
          %1706 = vst.msk [vmem:[%s325 + $0x58] sm:$0xff] %vm1547, %v1690
          %1707 = vst.msk [vmem:[%s325 + $0x60] sm:$0xff] %vm1547, %v1691
          %1708 = vst.msk [vmem:[%s325 + $0x68] sm:$0xff] %vm1547, %v1692
          %1709 = vst.msk [vmem:[%s325 + $0x70] sm:$0xff] %vm1547, %v1693
          %1710 = vst.msk [vmem:[%s325 + $0x78] sm:$0xff] %vm1547, %v1694
        $region52: #{tpu_custom_call.1} parent=39 // pred_fallthru
          _
        %s1711 = smul.u32 16, %s21
        %p1712 = scmp.lt.s32.totalorder %s1711, 31
        %s1713 = scalar_select %p1712, %s1711, 31
        %s1714 = smul.addr %s1713, 8
        %s1715 = scalar_lea.vmem %s5, %s1714
        // Predicated region
        $region53: #{tpu_custom_call.1} parent=39 // pred_check
          %p1716 = pneg %p177
        $region54: #{tpu_custom_call.1} parent=39 // pred_check_branch
          %1718 = sbr.rel (%p1716) target = $region56
        $region55: #{tpu_custom_call.1} parent=39 // pred_region
          %s1719 = smul.u32 16, %s21
        $region56: #{tpu_custom_call.1} parent=39 // pred_fallthru
          _
      $region40: #{tpu_custom_call.1} parent=5 // pred_fallthru
        _
      %p1720 = scmp.le.s32.totalorder 2, %s12
      // Predicated region
      $region57: #{tpu_custom_call.1} parent=5 // pred_check
        %p1721 = pneg %p1720
      $region58: #{tpu_custom_call.1} parent=5 // pred_check_branch
        %1723 = sbr.rel (%p1721) target = $region60
      $region59: #{tpu_custom_call.1} parent=5 // pred_region
        %s1724 = ssub.s32 %s12, 2
        // Predicated region
        $region61: #{tpu_custom_call.1} parent=59 // pred_check
          %p1725 = pneg %p183
        $region62: #{tpu_custom_call.1} parent=59 // pred_check_branch
          %1727 = sbr.rel (%p1725) target = $region64
        $region63: #{tpu_custom_call.1} parent=59 // pred_region
          %s1728 = smul.u32 16, %s23
          %p1729 = scmp.lt.s32.totalorder %s1728, 31
          %s1730 = scalar_select %p1729, %s1728, 31
          %s1731 = smul.addr %s1730, 8
          %s1732 = scalar_lea.vmem %s5, %s1731
        $region64: #{tpu_custom_call.1} parent=59 // pred_fallthru
          _
      $region60: #{tpu_custom_call.1} parent=5 // pred_fallthru
        _
    $region6: #{tpu_custom_call.1} parent=1 // loop_footer
      %s16 = sadd.s32 1, %s12
    $region7: #{tpu_custom_call.1} parent=1 // loop_footer_branch
      %11 = sbr.rel target = $region3
    $region8: #{tpu_custom_call.1} parent=1 // loop_exit
      _
    %1733 = vsyncpa [#allocation5], 1
    %s1734 = scalar_lea.sflag [#allocation5], 1
    %1735 = vsyncpa %s1734, 1

</llo_original>
